<compile_context>
chip_gen: v7x
topology: tpu7x:2x2x1
jax: 0.10.0
libtpu: 0.0.40
codegen_flags: <defaults>
</compile_context>

<pallas_src>
import jax
import jax.numpy as jnp
from jax.experimental import pallas as pl
from jax.experimental.pallas import tpu as pltpu

EPS = 1e-10
LANE = 128      # TPU lane width: pad the small Dout to this for lane-dense stores
SUBLANE = 8     # f32 sublane tile


# ------------------------------ small helpers --------------------------------

def _round_up(x, m):
    return (x + m - 1) // m * m


def _pad_to(x, shape):
    if tuple(x.shape) == tuple(shape):
        return x
    return jnp.pad(x, [(0, t - s) for t, s in zip(shape, x.shape)])


def _pad_rows(x, n):
    # Pad only the leading (row) axis; no-op when already aligned.
    if x.shape[0] == n:
        return x
    return jnp.pad(x, [(0, n - x.shape[0])] + [(0, 0)] * (x.ndim - 1))


def _row_plan(rows, row_block):
    """Pick a row block (multiple of the 8-sublane tile) and the padded row count.

    The block is capped so the row grid has >= 2 steps whenever the batch allows
    it, letting dimension_semantics=("parallel",) shard rows across v7x's two
    TensorCores.  No effect on v5e/v6e (single TC).
    """
    bn = min(row_block, _round_up(rows, SUBLANE))
    if rows >= 2 * SUBLANE:
        bn = min(bn, _round_up((rows + 1) // 2, SUBLANE))
    return bn, _round_up(rows, bn)


def _elu(y):
    # ELU(alpha=1). Clamp the exp argument so the untaken branch of the select
    # can never produce inf; exact wherever it is taken.
    return jnp.where(y > 0.0, y, jnp.exp(jnp.minimum(y, 0.0)) - 1.0)


def _mm(x, w):
    # f32 MXU operands: at K=32 these matmuls are latency-bound, so f32 costs
    # ~nothing vs bf16 and avoids compounding per-layer rounding (review note).
    return jnp.dot(x, w, preferred_element_type=jnp.float32)


def _scene_attention(scene_sum, right, mask, ngh):
    # scene_sum (N,D), right/ngh (N,P,D), mask (N,P)  ->  (N,D)
    # Matches the source model: "normalization" divides by (sum of squares + EPS),
    # softmax is exp(sim)*mask / (sum + EPS) with no max-subtraction.
    # NOTE: the approx EUP reciprocal on a near-zero denominator (fully masked
    # row / zero scene sum) returns ~1e10 with ~2^-12 error; this is safe only
    # because it is always multiplied by an exact zero downstream - keep it so.
    inv = lambda x: pl.reciprocal(x + EPS, approx=True)          # EUP slot
    left_n = scene_sum * inv(jnp.sum(scene_sum * scene_sum, axis=1, keepdims=True))
    right_n = right * inv(jnp.sum(right * right, axis=2, keepdims=True))
    # softmax stage in 2D (bn, P): ~8x fewer vregs than the (bn, P, 1) layout.
    sim = jnp.sum(left_n[:, None, :] * right_n, axis=2)          # (N, P)
    sim = jnp.minimum(sim, 60.0)                                 # overflow guard
    miu = jnp.exp(sim) * mask
    miu = miu * inv(jnp.sum(miu, axis=1, keepdims=True))
    return jnp.sum(miu[:, :, None] * ngh, axis=1)                # (N, D)


# ------------------------------ Pallas kernels --------------------------------

def _cate_kernel(scene_sum_ref, right_ref, mask_ref, ngh_ref, w_ref, b_ref, o_ref):
    # Fused: scene attention + _Aggregation(2D -> D) of the cate model.
    ss = scene_sum_ref[...]                                      # (bn, D), read once
    agg = _scene_attention(ss, right_ref[...], mask_ref[...], ngh_ref[...])
    # concat-free: cat([scene_sum, agg]) @ W == scene_sum @ W[:D] + agg @ W[D:]
    y = _mm(ss, w_ref[0]) + _mm(agg, w_ref[1]) + b_ref[...]
    o_ref[...] = _elu(y)          # (bn, 128) lane-dense store; padded cols stay 0


def _item_rate_kernel(u_sum_ref, scene_sum_ref, right_ref, mask_ref, ngh_ref,
                      cate_emb_ref, user_in_ref, w_ref, b_ref, o_ref):
    # All 11 (D,D) weights live in one slab, all biases + the rate head in another;
    # static ref indices keep this at 2 input pipelines instead of 21.
    W = lambda k: w_ref[k]                  # (D, D)
    Brow = lambda k: b_ref[k:k + 1, :]      # (1, D)

    # ---- user model: _Aggregation(D -> D) over self + item-neighbor sum ----
    u_emb = _elu(_mm(u_sum_ref[...], W(0)) + Brow(0))

    # ---- item model: scene attention + two _Aggregation layers ----
    agg_i = _scene_attention(scene_sum_ref[...], right_ref[...],
                             mask_ref[...], ngh_ref[...])
    # concat-free: cat([i_cate_emb, agg_i]) @ W == i_cate_emb@W[:D] + agg_i@W[D:]
    item_space = _elu(_mm(cate_emb_ref[...], W(1)) + _mm(agg_i, W(2)) + Brow(1))
    user_space = _elu(_mm(user_in_ref[...], W(3)) + Brow(2))

    # ---- combine MLP (3 x _Aggregation), intermediates stay in vregs ----
    x = _elu(_mm(user_space, W(4)) + _mm(item_space, W(5)) + Brow(3))
    x = _elu(_mm(x, W(6)) + Brow(4))
    i_emb = _elu(_mm(x, W(7)) + Brow(5))

    # ---- rate prediction MLP ----
    r = _elu(_mm(u_emb, W(8)) + _mm(i_emb, W(9)) + Brow(6))
    r = _elu(_mm(r, W(10)) + Brow(7))
    # (D -> 1) head as a VPU reduction (no 1-lane MXU matmul); no ELU.
    o_ref[...] = jnp.sum(r * Brow(8), axis=1, keepdims=True) + b_ref[9:10, 0:1]


# ------------------------------ kernel wrappers --------------------------------

def cate_model_pallas(scene_sum, right, mask, ngh, w, b, *, row_block=1024):
    # scene_sum (C,D), right/ngh (C,P,D), mask (C,P), w (2D,D), b (D,)
    C, P, D = ngh.shape
    bn, Cp = _row_plan(C, row_block)
    Do = _round_up(D, LANE)                         # lane-dense output width

    # concat-free weight halves packed into one (2, D, Do) slab, f32.
    w_slab = jnp.stack([_pad_to(w[:D], (D, Do)),
                        _pad_to(w[D:], (D, Do))]).astype(jnp.float32)
    b_row = _pad_to(b.reshape(1, D), (1, Do)).astype(jnp.float32)

    inputs = [
        _pad_rows(scene_sum, Cp),                                # (Cp, D)   single copy
        _pad_rows(right, Cp),                                    # (Cp, P, D) natural P
        _pad_rows(mask.astype(jnp.float32), Cp),                 # (Cp, P)   2-D mask
        _pad_rows(ngh, Cp),                                      # (Cp, P, D)
        w_slab, b_row,
    ]
    in_specs = [
        pl.BlockSpec((bn, D), lambda i: (i, 0)),
        pl.BlockSpec((bn, P, D), lambda i: (i, 0, 0)),
        pl.BlockSpec((bn, P), lambda i: (i, 0)),
        pl.BlockSpec((bn, P, D), lambda i: (i, 0, 0)),
        pl.BlockSpec((2, D, Do), lambda i: (0, 0, 0)),
        pl.BlockSpec((1, Do), lambda i: (0, 0)),
    ]
    out = pl.pallas_call(
        _cate_kernel,
        out_shape=jax.ShapeDtypeStruct((Cp, Do), jnp.float32),
        grid_spec=pltpu.PrefetchScalarGridSpec(
            num_scalar_prefetch=0,
            grid=(Cp // bn,),
            in_specs=in_specs,
            out_specs=pl.BlockSpec((bn, Do), lambda i: (i, 0)),
        ),
        compiler_params=pltpu.CompilerParams(
            dimension_semantics=("parallel",)),     # shard rows across TCs on v7x
    )(*inputs)
    # Return the padded, lane-dense buffer; callers gather rows from it and only
    # then slice columns [:D] (avoids an extra relayout copy between kernels).
    return out


def item_rate_pallas(u_sum, scene_sum, right, mask, ngh, cate_emb, user_in,
                     params, *, row_block=1024):
    B, P, D = ngh.shape
    bn, Bp = _row_plan(B, row_block)
    # Per-step VMEM at bn=1024 and small P is a few MiB double-buffered - well
    # under the 32 MiB scoped default and v7x's 64 MiB physical VMEM.

    rows = [
        _pad_rows(u_sum, Bp),
        _pad_rows(scene_sum, Bp),                                # single packed copy
        _pad_rows(right, Bp),                                    # natural P (no pad)
        _pad_rows(mask.astype(jnp.float32), Bp),                 # 2-D mask
        _pad_rows(ngh, Bp),
        _pad_rows(cate_emb, Bp),
        _pad_rows(user_in, Bp),
    ]
    row_specs = [
        pl.BlockSpec((bn, D), lambda i: (i, 0)),
        pl.BlockSpec((bn, D), lambda i: (i, 0)),
        pl.BlockSpec((bn, P, D), lambda i: (i, 0, 0)),
        pl.BlockSpec((bn, P), lambda i: (i, 0)),
        pl.BlockSpec((bn, P, D), lambda i: (i, 0, 0)),
        pl.BlockSpec((bn, D), lambda i: (i, 0)),
        pl.BlockSpec((bn, D), lambda i: (i, 0)),
    ]

    f32 = jnp.float32
    # 11 (D,D) matrices in one slab; concat weights split into their two halves.
    w_slab = jnp.stack([
        params["um_aggre_w"],                                    # 0  user model
        params["im_items_w"][:D], params["im_items_w"][D:],      # 1,2 item model (cate / agg)
        params["im_users_w"],                                    # 3  item model (user space)
        params["cmb_w0"][:D], params["cmb_w0"][D:],              # 4,5 combine 0 (user / item)
        params["cmb_w1"], params["cmb_w2"],                      # 6,7
        params["rp_w0"][:D], params["rp_w0"][D:],                # 8,9 rate 0 (u_emb / i_emb)
        params["rp_w1"],                                         # 10
    ]).astype(f32)                                               # (11, D, D)
    # 8 biases + the (D->1) head weight row + its scalar bias in one slab.
    b_slab = jnp.stack([
        params["um_aggre_b"], params["im_items_b"], params["im_users_b"],
        params["cmb_b0"], params["cmb_b1"], params["cmb_b2"],
        params["rp_b0"], params["rp_b1"],
        params["rp_w2"].reshape(D),
        jnp.broadcast_to(params["rp_b2"], (D,)),
    ]).astype(f32)                                               # (10, D)

    w_specs = [
        pl.BlockSpec((11, D, D), lambda i: (0, 0, 0)),
        pl.BlockSpec((10, D), lambda i: (0, 0)),
    ]

    out = pl.pallas_call(
        _item_rate_kernel,
        out_shape=jax.ShapeDtypeStruct((Bp, 1), jnp.float32),
        grid_spec=pltpu.PrefetchScalarGridSpec(
            num_scalar_prefetch=0,
            grid=(Bp // bn,),
            in_specs=row_specs + w_specs,
            out_specs=pl.BlockSpec((bn, 1), lambda i: (i, 0)),
        ),
        compiler_params=pltpu.CompilerParams(
            dimension_semantics=("parallel",)),
    )(*rows, w_slab, b_slab)
    return out[:B]


# ------------------------------- forward pass ----------------------------------

def scenerec_forward(params, uids, iids, u_item_pad, i_item_pad, i_user_pad,
                     cate_scene_pad, c_cate_pad, i_cate_list):
    item_tab = params["item_emb"]
    user_tab = params["user_emb"]
    cate_tab = params["cate_emb"]
    scene_tab = params["scene_emb"]
    D = item_tab.shape[1]

    # ---- cate model: fused attention + _Aggregation (kernel 1) ----
    C = c_cate_pad.shape[0]
    cids = jnp.arange(C, dtype=jnp.int32)
    part_c = jnp.concatenate([cids[:, None], c_cate_pad], axis=1)        # (C, Pc+1)
    c_ngh = cate_tab[part_c]                                             # (C, Pc+1, D)
    mask_c = (part_c < cate_tab.shape[0] - 1).astype(jnp.float32)        # (C, Pc+1)
    right_c = jnp.sum(scene_tab[cate_scene_pad[part_c]], axis=2)         # (C, Pc+1, D)
    c_scene_sum = jnp.sum(scene_tab[cate_scene_pad], axis=1)             # (C, D)
    c_emb_pad = cate_model_pallas(c_scene_sum, right_c, mask_c, c_ngh,
                                  params["cm_aggre_w"], params["cm_aggre_b"])

    # ---- data-dependent gathers / neighbor sums stay in JAX ----
    u_sum = user_tab[uids] + jnp.sum(item_tab[u_item_pad], axis=1)       # (B, D)

    i_item = jnp.concatenate([iids[:, None], i_item_pad], axis=1)        # (B, Pi+1)
    i_nghItem = item_tab[i_item]                                         # (B, Pi+1, D)
    mask_i = (i_item < item_tab.shape[0] - 1).astype(jnp.float32)        # (B, Pi+1)
    right_i = jnp.sum(scene_tab[cate_scene_pad[i_cate_list[i_item]]], axis=2)
    i_scene_sum = jnp.sum(scene_tab[cate_scene_pad[i_cate_list[iids]]], axis=1)
    # Gather the needed cate embeddings from the padded, lane-dense kernel-1
    # output, then slice the valid columns (no up-front relayout copy).
    i_cate_emb = c_emb_pad[i_cate_list[iids]][:, :D]                     # (B, D)
    user_in = item_tab[iids] + jnp.sum(user_tab[i_user_pad], axis=1)     # (B, D)

    # ---- fused user/item models + combine MLP + rate prediction (kernel 2) ----
    return item_rate_pallas(u_sum, i_scene_sum, right_i, mask_i, i_nghItem,
                            i_cate_emb, user_in, params)                 # (B, 1)


# ----------------------------- pure-JAX reference -------------------------------

def _linear_ref(x, w, b, *, elu=True):
    y = x @ w + b
    return jnp.where(y > 0, y, jnp.exp(y) - 1.0) if elu else y


def _att_ref(scene_sum, right, mask, ngh):
    left = scene_sum[:, None, :] * mask[:, :, None]
    left = left / (jnp.sum(left ** 2, 2, keepdims=True) + EPS)
    rightn = right / (jnp.sum(right ** 2, 2, keepdims=True) + EPS)
    sim = jnp.sum(left * rightn, 2)
    miu = jnp.exp(sim) * mask
    miu = miu / (jnp.sum(miu, 1, keepdims=True) + EPS)
    return jnp.sum(miu[:, :, None] * ngh, 1)


def scenerec_forward_ref(params, uids, iids, u_item_pad, i_item_pad, i_user_pad,
                         cate_scene_pad, c_cate_pad, i_cate_list):
    item_tab, user_tab = params["item_emb"], params["user_emb"]
    cate_tab, scene_tab = params["cate_emb"], params["scene_emb"]

    u_sum = user_tab[uids] + jnp.sum(item_tab[u_item_pad], axis=1)
    u_emb = _linear_ref(u_sum, params["um_aggre_w"], params["um_aggre_b"])

    C = c_cate_pad.shape[0]
    cids = jnp.arange(C, dtype=jnp.int32)
    part_c = jnp.concatenate([cids[:, None], c_cate_pad], axis=1)
    c_ngh = cate_tab[part_c]
    mask_c = (part_c < cate_tab.shape[0] - 1).astype(jnp.float32)
    right_c = jnp.sum(scene_tab[cate_scene_pad[part_c]], axis=2)
    c_scene_sum = jnp.sum(scene_tab[cate_scene_pad], axis=1)
    agg_c = _att_ref(c_scene_sum, right_c, mask_c, c_ngh)
    c_emb = _linear_ref(jnp.concatenate([c_scene_sum, agg_c], axis=1),
                        params["cm_aggre_w"], params["cm_aggre_b"])

    i_item = jnp.concatenate([iids[:, None], i_item_pad], axis=1)
    i_nghItem = item_tab[i_item]
    mask_i = (i_item < item_tab.shape[0] - 1).astype(jnp.float32)
    right_i = jnp.sum(scene_tab[cate_scene_pad[i_cate_list[i_item]]], axis=2)
    i_scene_sum = jnp.sum(scene_tab[cate_scene_pad[i_cate_list[iids]]], axis=1)
    agg_i = _att_ref(i_scene_sum, right_i, mask_i, i_nghItem)
    i_cate_emb = c_emb[i_cate_list[iids]]
    itemSpace = _linear_ref(jnp.concatenate([i_cate_emb, agg_i], axis=1),
                            params["im_items_w"], params["im_items_b"])
    userSpace = _linear_ref(item_tab[iids] + jnp.sum(user_tab[i_user_pad], axis=1),
                            params["im_users_w"], params["im_users_b"])
    x = _linear_ref(jnp.concatenate([userSpace, itemSpace], axis=1),
                    params["cmb_w0"], params["cmb_b0"])
    x = _linear_ref(x, params["cmb_w1"], params["cmb_b1"])
    i_emb = _linear_ref(x, params["cmb_w2"], params["cmb_b2"])
    r = _linear_ref(jnp.concatenate([u_emb, i_emb], axis=1),
                    params["rp_w0"], params["rp_b0"])
    r = _linear_ref(r, params["rp_w1"], params["rp_b1"])
    return _linear_ref(r, params["rp_w2"], params["rp_b2"], elu=False)


# ------------------------------- parameters -------------------------------------

def init_params(key, n_users_rows, n_cates_rows, n_scenes_rows, n_items_rows, D):
    keys = jax.random.split(key, 40)
    it = iter(range(40))

    def emb(n_rows):
        w = jax.random.normal(keys[next(it)], (n_rows, D), jnp.float32) * 0.1
        return w.at[n_rows - 1].set(0.0)                    # padding_idx row is zero

    def lin(din, dout):
        bound = 1.0 / (din ** 0.5)
        w = jax.random.uniform(keys[next(it)], (din, dout), jnp.float32, -bound, bound)
        b = jax.random.uniform(keys[next(it)], (dout,), jnp.float32, -bound, bound)
        return w, b

    params = {
        "cate_emb": emb(n_cates_rows),
        "scene_emb": emb(n_scenes_rows),
        "item_emb": emb(n_items_rows),
        "user_emb": emb(n_users_rows),
    }
    params["um_aggre_w"], params["um_aggre_b"] = lin(D, D)          # user_model.aggre_items
    params["cm_aggre_w"], params["cm_aggre_b"] = lin(2 * D, D)      # cate_model.aggre_cates
    params["im_items_w"], params["im_items_b"] = lin(2 * D, D)      # item_model.aggre_items
    params["im_users_w"], params["im_users_b"] = lin(D, D)          # item_model.aggre_users
    params["cmb_w0"], params["cmb_b0"] = lin(2 * D, D)              # combine_mlp
    params["cmb_w1"], params["cmb_b1"] = lin(D, D)
    params["cmb_w2"], params["cmb_b2"] = lin(D, D)
    params["rp_w0"], params["rp_b0"] = lin(2 * D, D)                # rate_pred
    params["rp_w1"], params["rp_b1"] = lin(D, D)
    params["rp_w2"], params["rp_b2"] = lin(D, 1)
    # TODO(synk): user_items_att / item_users_att MLPs are defined in __init__
    # but never used in forward(); omitted.
    return params


# ----------------------------------- main ----------------------------------------

if __name__ == "__main__":
    D = 32          # emb_dim
    B = 8           # batch
    num_users, num_items, num_cates, num_scenes = 20, 30, 6, 5
    Pu, Pi, Pv, Pc, S = 4, 4, 3, 3, 3

    NU, NI, NC, NS = num_users + 1, num_items + 1, num_cates + 1, num_scenes + 1

    key = jax.random.PRNGKey(0)
    k = jax.random.split(key, 16)

    # static relational tables
    cate_scene_pad = jax.random.randint(k[0], (NC, S), 0, NS, dtype=jnp.int32)
    cate_scene_pad = cate_scene_pad.at[NC - 1].set(NS - 1)          # padding cate -> padding scenes
    c_cate_pad = jax.random.randint(k[1], (NC, Pc), 0, NC, dtype=jnp.int32)
    c_cate_pad = c_cate_pad.at[NC - 1].set(NC - 1)
    i_cate_list = jax.random.randint(k[2], (NI,), 0, NC - 1, dtype=jnp.int32)
    i_cate_list = i_cate_list.at[NI - 1].set(NC - 1)                # padding item -> padding cate

    # batch inputs
    uids = jax.random.randint(k[3], (B,), 0, NU - 1, dtype=jnp.int32)
    iids = jax.random.randint(k[4], (B,), 0, NI - 1, dtype=jnp.int32)
    u_item_pad = jax.random.randint(k[5], (B, Pu), 0, NI, dtype=jnp.int32)
    i_item_pad = jax.random.randint(k[6], (B, Pi), 0, NI, dtype=jnp.int32)
    i_user_pad = jax.random.randint(k[7], (B, Pv), 0, NU, dtype=jnp.int32)

    params = init_params(k[8], NU, NC, NS, NI, D)

    fwd_pallas = jax.jit(scenerec_forward)
    fwd_ref = jax.jit(scenerec_forward_ref)

    args = (params, uids, iids, u_item_pad, i_item_pad, i_user_pad,
            cate_scene_pad, c_cate_pad, i_cate_list)

    r_pallas = jax.block_until_ready(fwd_pallas(*args))
    r_ref = jax.block_until_ready(fwd_ref(*args))

    assert r_pallas.shape == (B, 1), r_pallas.shape
    # Full-f32 MXU operands now; the remaining deltas vs. the pure-f32 reference
    # come only from the approx EUP reciprocals inside the attention.
    assert jnp.allclose(r_pallas, r_ref, rtol=1e-2, atol=1e-2), (r_pallas, r_ref)

    print("KERNEL_OK")
</pallas_src>

<mosaic_0001>
module attributes {stable_mosaic.version = 11 : i64} {
  func.func @_cate_kernel(%arg0: i32, %arg1: memref<8x32xf32, #tpu.memory_space<vmem>>, %arg2: memref<8x4x32xf32, #tpu.memory_space<vmem>>, %arg3: memref<8x4xf32, #tpu.memory_space<vmem>>, %arg4: memref<8x4x32xf32, #tpu.memory_space<vmem>>, %arg5: memref<2x32x128xf32, #tpu.memory_space<vmem>>, %arg6: memref<1x128xf32, #tpu.memory_space<vmem>>, %arg7: memref<8x128xf32, #tpu.memory_space<vmem>>) attributes {dimension_semantics = [#tpu.dimension_semantics<parallel>], iteration_bounds = array<i64: 1>, scalar_prefetch = 0 : i64, scratch_operands = 0 : i64, tpu.core_type = #tpu.core_type<tc>, window_params = [{transform_indices = @transform_0, window_bounds = array<i64: 8, 32>}, {transform_indices = @transform_1, window_bounds = array<i64: 8, 4, 32>}, {transform_indices = @transform_2, window_bounds = array<i64: 8, 4>}, {transform_indices = @transform_3, window_bounds = array<i64: 8, 4, 32>}, {pipeline_mode = #tpu.pipeline_mode<synchronous>, transform_indices = @transform_4, window_bounds = array<i64: 2, 32, 128>}, {pipeline_mode = #tpu.pipeline_mode<synchronous>, transform_indices = @transform_5, window_bounds = array<i64: 1, 128>}, {transform_indices = @transform_6, window_bounds = array<i64: 8, 128>}]} {
    %c0 = arith.constant 0 : index
    %c0_0 = arith.constant 0 : index
    %0 = vector.load %arg1[%c0, %c0_0] : memref<8x32xf32, #tpu.memory_space<vmem>>, vector<8x32xf32>
    %c0_1 = arith.constant 0 : index
    %c0_2 = arith.constant 0 : index
    %c0_3 = arith.constant 0 : index
    %1 = vector.load %arg2[%c0_1, %c0_2, %c0_3] : memref<8x4x32xf32, #tpu.memory_space<vmem>>, vector<8x4x32xf32>
    %c0_4 = arith.constant 0 : index
    %c0_5 = arith.constant 0 : index
    %2 = vector.load %arg3[%c0_4, %c0_5] : memref<8x4xf32, #tpu.memory_space<vmem>>, vector<8x4xf32>
    %c0_6 = arith.constant 0 : index
    %c0_7 = arith.constant 0 : index
    %c0_8 = arith.constant 0 : index
    %3 = vector.load %arg4[%c0_6, %c0_7, %c0_8] : memref<8x4x32xf32, #tpu.memory_space<vmem>>, vector<8x4x32xf32>
    %4 = arith.mulf %0, %0 : vector<8x32xf32>
    %cst = arith.constant dense<0.000000e+00> : vector<8xf32>
    %5 = vector.multi_reduction <add>, %4, %cst [1] : vector<8x32xf32> to vector<8xf32>
    %6 = vector.shape_cast %5 : vector<8xf32> to vector<8x1xf32>
    %cst_9 = arith.constant 1.000000e-10 : f32
    %7 = vector.broadcast %cst_9 : f32 to vector<8x1xf32>
    %8 = arith.addf %6, %7 : vector<8x1xf32>
    %9 = tpu.reciprocal %8 {approx = true} : vector<8x1xf32> -> vector<8x1xf32>
    %10 = vector.broadcast %9 : vector<8x1xf32> to vector<8x32xf32>
    %11 = arith.mulf %0, %10 : vector<8x32xf32>
    %12 = arith.mulf %1, %1 : vector<8x4x32xf32>
    %cst_10 = arith.constant dense<0.000000e+00> : vector<8x4xf32>
    %13 = vector.multi_reduction <add>, %12, %cst_10 [2] : vector<8x4x32xf32> to vector<8x4xf32>
    %14 = vector.shape_cast %13 : vector<8x4xf32> to vector<8x4x1xf32>
    %cst_11 = arith.constant 1.000000e-10 : f32
    %15 = vector.broadcast %cst_11 : f32 to vector<8x4x1xf32>
    %16 = arith.addf %14, %15 : vector<8x4x1xf32>
    %17 = tpu.reciprocal %16 {approx = true} : vector<8x4x1xf32> -> vector<8x4x1xf32>
    %18 = vector.broadcast %17 : vector<8x4x1xf32> to vector<8x4x32xf32>
    %19 = arith.mulf %1, %18 : vector<8x4x32xf32>
    %20 = vector.shape_cast %11 : vector<8x32xf32> to vector<8x1x32xf32>
    %21 = vector.broadcast %20 : vector<8x1x32xf32> to vector<8x4x32xf32>
    %22 = arith.mulf %21, %19 : vector<8x4x32xf32>
    %cst_12 = arith.constant dense<0.000000e+00> : vector<8x4xf32>
    %23 = vector.multi_reduction <add>, %22, %cst_12 [2] : vector<8x4x32xf32> to vector<8x4xf32>
    %cst_13 = arith.constant 6.000000e+01 : f32
    %24 = vector.broadcast %cst_13 : f32 to vector<8x4xf32>
    %25 = arith.minimumf %23, %24 : vector<8x4xf32>
    %26 = math.exp %25 : vector<8x4xf32>
    %27 = arith.mulf %26, %2 : vector<8x4xf32>
    %cst_14 = arith.constant dense<0.000000e+00> : vector<8xf32>
    %28 = vector.multi_reduction <add>, %27, %cst_14 [1] : vector<8x4xf32> to vector<8xf32>
    %29 = vector.shape_cast %28 : vector<8xf32> to vector<8x1xf32>
    %cst_15 = arith.constant 1.000000e-10 : f32
    %30 = vector.broadcast %cst_15 : f32 to vector<8x1xf32>
    %31 = arith.addf %29, %30 : vector<8x1xf32>
    %32 = tpu.reciprocal %31 {approx = true} : vector<8x1xf32> -> vector<8x1xf32>
    %33 = vector.broadcast %32 : vector<8x1xf32> to vector<8x4xf32>
    %34 = arith.mulf %27, %33 : vector<8x4xf32>
    %35 = vector.shape_cast %34 : vector<8x4xf32> to vector<8x4x1xf32>
    %36 = vector.broadcast %35 : vector<8x4x1xf32> to vector<8x4x32xf32>
    %37 = arith.mulf %36, %3 : vector<8x4x32xf32>
    %cst_16 = arith.constant dense<0.000000e+00> : vector<8x32xf32>
    %38 = vector.multi_reduction <add>, %37, %cst_16 [1] : vector<8x4x32xf32> to vector<8x32xf32>
    %c0_17 = arith.constant 0 : index
    %c0_18 = arith.constant 0 : index
    %c0_19 = arith.constant 0 : index
    %39 = vector.load %arg5[%c0_17, %c0_18, %c0_19] : memref<2x32x128xf32, #tpu.memory_space<vmem>>, vector<1x32x128xf32>
    %40 = vector.shape_cast %39 : vector<1x32x128xf32> to vector<32x128xf32>
    %cst_20 = arith.constant dense<0.000000e+00> : vector<8x128xf32>
    %41 = tpu.matmul %0, %40, %cst_20 {dimension_numbers = #tpu.dot_dimension_numbers<[1], [0], [0], [1], [0, 0, 1, 1], [], []>} : vector<8x32xf32>, vector<32x128xf32>, vector<8x128xf32> -> vector<8x128xf32>
    %c1 = arith.constant 1 : index
    %c0_21 = arith.constant 0 : index
    %c0_22 = arith.constant 0 : index
    %42 = vector.load %arg5[%c1, %c0_21, %c0_22] : memref<2x32x128xf32, #tpu.memory_space<vmem>>, vector<1x32x128xf32>
    %43 = vector.shape_cast %42 : vector<1x32x128xf32> to vector<32x128xf32>
    %cst_23 = arith.constant dense<0.000000e+00> : vector<8x128xf32>
    %44 = tpu.matmul %38, %43, %cst_23 {dimension_numbers = #tpu.dot_dimension_numbers<[1], [0], [0], [1], [0, 0, 1, 1], [], []>} : vector<8x32xf32>, vector<32x128xf32>, vector<8x128xf32> -> vector<8x128xf32>
    %45 = arith.addf %41, %44 : vector<8x128xf32>
    %c0_24 = arith.constant 0 : index
    %c0_25 = arith.constant 0 : index
    %46 = vector.load %arg6[%c0_24, %c0_25] : memref<1x128xf32, #tpu.memory_space<vmem>>, vector<1x128xf32>
    %47 = vector.broadcast %46 : vector<1x128xf32> to vector<8x128xf32>
    %48 = arith.addf %45, %47 : vector<8x128xf32>
    %cst_26 = arith.constant 0.000000e+00 : f32
    %49 = vector.broadcast %cst_26 : f32 to vector<8x128xf32>
    %50 = arith.cmpf ogt, %48, %49 : vector<8x128xf32>
    %cst_27 = arith.constant 0.000000e+00 : f32
    %51 = vector.broadcast %cst_27 : f32 to vector<8x128xf32>
    %52 = arith.minimumf %48, %51 : vector<8x128xf32>
    %53 = math.exp %52 : vector<8x128xf32>
    %cst_28 = arith.constant 1.000000e+00 : f32
    %54 = vector.broadcast %cst_28 : f32 to vector<8x128xf32>
    %55 = arith.subf %53, %54 : vector<8x128xf32>
    %56 = arith.select %50, %48, %55 : vector<8x128xi1>, vector<8x128xf32>
    %c0_29 = arith.constant 0 : index
    %c0_30 = arith.constant 0 : index
    %57 = vector.load %arg7[%c0_29, %c0_30] : memref<8x128xf32, #tpu.memory_space<vmem>>, vector<8x128xf32>
    tpu.vector_store %arg7[%c0_29, %c0_30], %56 {strides = array<i32>} : memref<8x128xf32, #tpu.memory_space<vmem>>, vector<8x128xf32>,
    return
  }
  func.func @transform_0(%arg0: i32) -> (i32, i32) {
    %c0_i32 = arith.constant 0 : i32
    %c0_i32_0 = arith.constant 0 : i32
    return %arg0, %c0_i32 : i32, i32
  }
  func.func @transform_1(%arg0: i32) -> (i32, i32, i32) {
    %c0_i32 = arith.constant 0 : i32
    %c0_i32_0 = arith.constant 0 : i32
    %c0_i32_1 = arith.constant 0 : i32
    return %arg0, %c0_i32, %c0_i32_0 : i32, i32, i32
  }
  func.func @transform_2(%arg0: i32) -> (i32, i32) {
    %c0_i32 = arith.constant 0 : i32
    %c0_i32_0 = arith.constant 0 : i32
    return %arg0, %c0_i32 : i32, i32
  }
  func.func @transform_3(%arg0: i32) -> (i32, i32, i32) {
    %c0_i32 = arith.constant 0 : i32
    %c0_i32_0 = arith.constant 0 : i32
    %c0_i32_1 = arith.constant 0 : i32
    return %arg0, %c0_i32, %c0_i32_0 : i32, i32, i32
  }
  func.func @transform_4(%arg0: i32) -> (i32, i32, i32) {
    %c0_i32 = arith.constant 0 : i32
    %c0_i32_0 = arith.constant 0 : i32
    %c0_i32_1 = arith.constant 0 : i32
    %c0_i32_2 = arith.constant 0 : i32
    return %c0_i32, %c0_i32_0, %c0_i32_1 : i32, i32, i32
  }
  func.func @transform_5(%arg0: i32) -> (i32, i32) {
    %c0_i32 = arith.constant 0 : i32
    %c0_i32_0 = arith.constant 0 : i32
    %c0_i32_1 = arith.constant 0 : i32
    return %c0_i32, %c0_i32_0 : i32, i32
  }
  func.func @transform_6(%arg0: i32) -> (i32, i32) {
    %c0_i32 = arith.constant 0 : i32
    %c0_i32_0 = arith.constant 0 : i32
    return %arg0, %c0_i32 : i32, i32
  }
}

module attributes {stable_mosaic.version = 11 : i64} {
  func.func @_item_rate_kernel(%arg0: i32, %arg1: memref<8x32xf32, #tpu.memory_space<vmem>>, %arg2: memref<8x32xf32, #tpu.memory_space<vmem>>, %arg3: memref<8x5x32xf32, #tpu.memory_space<vmem>>, %arg4: memref<8x5xf32, #tpu.memory_space<vmem>>, %arg5: memref<8x5x32xf32, #tpu.memory_space<vmem>>, %arg6: memref<8x32xf32, #tpu.memory_space<vmem>>, %arg7: memref<8x32xf32, #tpu.memory_space<vmem>>, %arg8: memref<11x32x32xf32, #tpu.memory_space<vmem>>, %arg9: memref<10x32xf32, #tpu.memory_space<vmem>>, %arg10: memref<8x1xf32, #tpu.memory_space<vmem>>) attributes {dimension_semantics = [#tpu.dimension_semantics<parallel>], iteration_bounds = array<i64: 1>, scalar_prefetch = 0 : i64, scratch_operands = 0 : i64, tpu.core_type = #tpu.core_type<tc>, window_params = [{transform_indices = @transform_0, window_bounds = array<i64: 8, 32>}, {transform_indices = @transform_1, window_bounds = array<i64: 8, 32>}, {transform_indices = @transform_2, window_bounds = array<i64: 8, 5, 32>}, {transform_indices = @transform_3, window_bounds = array<i64: 8, 5>}, {transform_indices = @transform_4, window_bounds = array<i64: 8, 5, 32>}, {transform_indices = @transform_5, window_bounds = array<i64: 8, 32>}, {transform_indices = @transform_6, window_bounds = array<i64: 8, 32>}, {pipeline_mode = #tpu.pipeline_mode<synchronous>, transform_indices = @transform_7, window_bounds = array<i64: 11, 32, 32>}, {pipeline_mode = #tpu.pipeline_mode<synchronous>, transform_indices = @transform_8, window_bounds = array<i64: 10, 32>}, {transform_indices = @transform_9, window_bounds = array<i64: 8, 1>}]} {
    %c0 = arith.constant 0 : index
    %c0_0 = arith.constant 0 : index
    %0 = vector.load %arg1[%c0, %c0_0] : memref<8x32xf32, #tpu.memory_space<vmem>>, vector<8x32xf32>
    %c0_1 = arith.constant 0 : index
    %c0_2 = arith.constant 0 : index
    %c0_3 = arith.constant 0 : index
    %1 = vector.load %arg8[%c0_1, %c0_2, %c0_3] : memref<11x32x32xf32, #tpu.memory_space<vmem>>, vector<1x32x32xf32>
    %2 = vector.shape_cast %1 : vector<1x32x32xf32> to vector<32x32xf32>
    %cst = arith.constant dense<0.000000e+00> : vector<8x32xf32>
    %3 = tpu.matmul %0, %2, %cst {dimension_numbers = #tpu.dot_dimension_numbers<[1], [0], [0], [1], [0, 0, 1, 1], [], []>} : vector<8x32xf32>, vector<32x32xf32>, vector<8x32xf32> -> vector<8x32xf32>
    %c0_4 = arith.constant 0 : index
    %c0_5 = arith.constant 0 : index
    %4 = vector.load %arg9[%c0_4, %c0_5] : memref<10x32xf32, #tpu.memory_space<vmem>>, vector<1x32xf32>
    %5 = vector.broadcast %4 : vector<1x32xf32> to vector<8x32xf32>
    %6 = arith.addf %3, %5 : vector<8x32xf32>
    %cst_6 = arith.constant 0.000000e+00 : f32
    %7 = vector.broadcast %cst_6 : f32 to vector<8x32xf32>
    %8 = arith.cmpf ogt, %6, %7 : vector<8x32xf32>
    %cst_7 = arith.constant 0.000000e+00 : f32
    %9 = vector.broadcast %cst_7 : f32 to vector<8x32xf32>
    %10 = arith.minimumf %6, %9 : vector<8x32xf32>
    %11 = math.exp %10 : vector<8x32xf32>
    %cst_8 = arith.constant 1.000000e+00 : f32
    %12 = vector.broadcast %cst_8 : f32 to vector<8x32xf32>
    %13 = arith.subf %11, %12 : vector<8x32xf32>
    %14 = arith.select %8, %6, %13 : vector<8x32xi1>, vector<8x32xf32>
    %c0_9 = arith.constant 0 : index
    %c0_10 = arith.constant 0 : index
    %15 = vector.load %arg2[%c0_9, %c0_10] : memref<8x32xf32, #tpu.memory_space<vmem>>, vector<8x32xf32>
    %c0_11 = arith.constant 0 : index
    %c0_12 = arith.constant 0 : index
    %c0_13 = arith.constant 0 : index
    %16 = vector.load %arg3[%c0_11, %c0_12, %c0_13] : memref<8x5x32xf32, #tpu.memory_space<vmem>>, vector<8x5x32xf32>
    %c0_14 = arith.constant 0 : index
    %c0_15 = arith.constant 0 : index
    %17 = vector.load %arg4[%c0_14, %c0_15] : memref<8x5xf32, #tpu.memory_space<vmem>>, vector<8x5xf32>
    %c0_16 = arith.constant 0 : index
    %c0_17 = arith.constant 0 : index
    %c0_18 = arith.constant 0 : index
    %18 = vector.load %arg5[%c0_16, %c0_17, %c0_18] : memref<8x5x32xf32, #tpu.memory_space<vmem>>, vector<8x5x32xf32>
    %19 = arith.mulf %15, %15 : vector<8x32xf32>
    %cst_19 = arith.constant dense<0.000000e+00> : vector<8xf32>
    %20 = vector.multi_reduction <add>, %19, %cst_19 [1] : vector<8x32xf32> to vector<8xf32>
    %21 = vector.shape_cast %20 : vector<8xf32> to vector<8x1xf32>
    %cst_20 = arith.constant 1.000000e-10 : f32
    %22 = vector.broadcast %cst_20 : f32 to vector<8x1xf32>
    %23 = arith.addf %21, %22 : vector<8x1xf32>
    %24 = tpu.reciprocal %23 {approx = true} : vector<8x1xf32> -> vector<8x1xf32>
    %25 = vector.broadcast %24 : vector<8x1xf32> to vector<8x32xf32>
    %26 = arith.mulf %15, %25 : vector<8x32xf32>
    %27 = arith.mulf %16, %16 : vector<8x5x32xf32>
    %cst_21 = arith.constant dense<0.000000e+00> : vector<8x5xf32>
    %28 = vector.multi_reduction <add>, %27, %cst_21 [2] : vector<8x5x32xf32> to vector<8x5xf32>
    %29 = vector.shape_cast %28 : vector<8x5xf32> to vector<8x5x1xf32>
    %cst_22 = arith.constant 1.000000e-10 : f32
    %30 = vector.broadcast %cst_22 : f32 to vector<8x5x1xf32>
    %31 = arith.addf %29, %30 : vector<8x5x1xf32>
    %32 = tpu.reciprocal %31 {approx = true} : vector<8x5x1xf32> -> vector<8x5x1xf32>
    %33 = vector.broadcast %32 : vector<8x5x1xf32> to vector<8x5x32xf32>
    %34 = arith.mulf %16, %33 : vector<8x5x32xf32>
    %35 = vector.shape_cast %26 : vector<8x32xf32> to vector<8x1x32xf32>
    %36 = vector.broadcast %35 : vector<8x1x32xf32> to vector<8x5x32xf32>
    %37 = arith.mulf %36, %34 : vector<8x5x32xf32>
    %cst_23 = arith.constant dense<0.000000e+00> : vector<8x5xf32>
    %38 = vector.multi_reduction <add>, %37, %cst_23 [2] : vector<8x5x32xf32> to vector<8x5xf32>
    %cst_24 = arith.constant 6.000000e+01 : f32
    %39 = vector.broadcast %cst_24 : f32 to vector<8x5xf32>
    %40 = arith.minimumf %38, %39 : vector<8x5xf32>
    %41 = math.exp %40 : vector<8x5xf32>
    %42 = arith.mulf %41, %17 : vector<8x5xf32>
    %cst_25 = arith.constant dense<0.000000e+00> : vector<8xf32>
    %43 = vector.multi_reduction <add>, %42, %cst_25 [1] : vector<8x5xf32> to vector<8xf32>
    %44 = vector.shape_cast %43 : vector<8xf32> to vector<8x1xf32>
    %cst_26 = arith.constant 1.000000e-10 : f32
    %45 = vector.broadcast %cst_26 : f32 to vector<8x1xf32>
    %46 = arith.addf %44, %45 : vector<8x1xf32>
    %47 = tpu.reciprocal %46 {approx = true} : vector<8x1xf32> -> vector<8x1xf32>
    %48 = vector.broadcast %47 : vector<8x1xf32> to vector<8x5xf32>
    %49 = arith.mulf %42, %48 : vector<8x5xf32>
    %50 = vector.shape_cast %49 : vector<8x5xf32> to vector<8x5x1xf32>
    %51 = vector.broadcast %50 : vector<8x5x1xf32> to vector<8x5x32xf32>
    %52 = arith.mulf %51, %18 : vector<8x5x32xf32>
    %cst_27 = arith.constant dense<0.000000e+00> : vector<8x32xf32>
    %53 = vector.multi_reduction <add>, %52, %cst_27 [1] : vector<8x5x32xf32> to vector<8x32xf32>
    %c0_28 = arith.constant 0 : index
    %c0_29 = arith.constant 0 : index
    %54 = vector.load %arg6[%c0_28, %c0_29] : memref<8x32xf32, #tpu.memory_space<vmem>>, vector<8x32xf32>
    %c1 = arith.constant 1 : index
    %c0_30 = arith.constant 0 : index
    %c0_31 = arith.constant 0 : index
    %55 = vector.load %arg8[%c1, %c0_30, %c0_31] : memref<11x32x32xf32, #tpu.memory_space<vmem>>, vector<1x32x32xf32>
    %56 = vector.shape_cast %55 : vector<1x32x32xf32> to vector<32x32xf32>
    %cst_32 = arith.constant dense<0.000000e+00> : vector<8x32xf32>
    %57 = tpu.matmul %54, %56, %cst_32 {dimension_numbers = #tpu.dot_dimension_numbers<[1], [0], [0], [1], [0, 0, 1, 1], [], []>} : vector<8x32xf32>, vector<32x32xf32>, vector<8x32xf32> -> vector<8x32xf32>
    %c2 = arith.constant 2 : index
    %c0_33 = arith.constant 0 : index
    %c0_34 = arith.constant 0 : index
    %58 = vector.load %arg8[%c2, %c0_33, %c0_34] : memref<11x32x32xf32, #tpu.memory_space<vmem>>, vector<1x32x32xf32>
    %59 = vector.shape_cast %58 : vector<1x32x32xf32> to vector<32x32xf32>
    %cst_35 = arith.constant dense<0.000000e+00> : vector<8x32xf32>
    %60 = tpu.matmul %53, %59, %cst_35 {dimension_numbers = #tpu.dot_dimension_numbers<[1], [0], [0], [1], [0, 0, 1, 1], [], []>} : vector<8x32xf32>, vector<32x32xf32>, vector<8x32xf32> -> vector<8x32xf32>
    %61 = arith.addf %57, %60 : vector<8x32xf32>
    %c1_36 = arith.constant 1 : index
    %c0_37 = arith.constant 0 : index
    %62 = vector.load %arg9[%c1_36, %c0_37] : memref<10x32xf32, #tpu.memory_space<vmem>>, vector<1x32xf32>
    %63 = vector.broadcast %62 : vector<1x32xf32> to vector<8x32xf32>
    %64 = arith.addf %61, %63 : vector<8x32xf32>
    %cst_38 = arith.constant 0.000000e+00 : f32
    %65 = vector.broadcast %cst_38 : f32 to vector<8x32xf32>
    %66 = arith.cmpf ogt, %64, %65 : vector<8x32xf32>
    %cst_39 = arith.constant 0.000000e+00 : f32
    %67 = vector.broadcast %cst_39 : f32 to vector<8x32xf32>
    %68 = arith.minimumf %64, %67 : vector<8x32xf32>
    %69 = math.exp %68 : vector<8x32xf32>
    %cst_40 = arith.constant 1.000000e+00 : f32
    %70 = vector.broadcast %cst_40 : f32 to vector<8x32xf32>
    %71 = arith.subf %69, %70 : vector<8x32xf32>
    %72 = arith.select %66, %64, %71 : vector<8x32xi1>, vector<8x32xf32>
    %c0_41 = arith.constant 0 : index
    %c0_42 = arith.constant 0 : index
    %73 = vector.load %arg7[%c0_41, %c0_42] : memref<8x32xf32, #tpu.memory_space<vmem>>, vector<8x32xf32>
    %c3 = arith.constant 3 : index
    %c0_43 = arith.constant 0 : index
    %c0_44 = arith.constant 0 : index
    %74 = vector.load %arg8[%c3, %c0_43, %c0_44] : memref<11x32x32xf32, #tpu.memory_space<vmem>>, vector<1x32x32xf32>
    %75 = vector.shape_cast %74 : vector<1x32x32xf32> to vector<32x32xf32>
    %cst_45 = arith.constant dense<0.000000e+00> : vector<8x32xf32>
    %76 = tpu.matmul %73, %75, %cst_45 {dimension_numbers = #tpu.dot_dimension_numbers<[1], [0], [0], [1], [0, 0, 1, 1], [], []>} : vector<8x32xf32>, vector<32x32xf32>, vector<8x32xf32> -> vector<8x32xf32>
    %c2_46 = arith.constant 2 : index
    %c0_47 = arith.constant 0 : index
    %77 = vector.load %arg9[%c2_46, %c0_47] : memref<10x32xf32, #tpu.memory_space<vmem>>, vector<1x32xf32>
    %78 = vector.broadcast %77 : vector<1x32xf32> to vector<8x32xf32>
    %79 = arith.addf %76, %78 : vector<8x32xf32>
    %cst_48 = arith.constant 0.000000e+00 : f32
    %80 = vector.broadcast %cst_48 : f32 to vector<8x32xf32>
    %81 = arith.cmpf ogt, %79, %80 : vector<8x32xf32>
    %cst_49 = arith.constant 0.000000e+00 : f32
    %82 = vector.broadcast %cst_49 : f32 to vector<8x32xf32>
    %83 = arith.minimumf %79, %82 : vector<8x32xf32>
    %84 = math.exp %83 : vector<8x32xf32>
    %cst_50 = arith.constant 1.000000e+00 : f32
    %85 = vector.broadcast %cst_50 : f32 to vector<8x32xf32>
    %86 = arith.subf %84, %85 : vector<8x32xf32>
    %87 = arith.select %81, %79, %86 : vector<8x32xi1>, vector<8x32xf32>
    %c4 = arith.constant 4 : index
    %c0_51 = arith.constant 0 : index
    %c0_52 = arith.constant 0 : index
    %88 = vector.load %arg8[%c4, %c0_51, %c0_52] : memref<11x32x32xf32, #tpu.memory_space<vmem>>, vector<1x32x32xf32>
    %89 = vector.shape_cast %88 : vector<1x32x32xf32> to vector<32x32xf32>
    %cst_53 = arith.constant dense<0.000000e+00> : vector<8x32xf32>
    %90 = tpu.matmul %87, %89, %cst_53 {dimension_numbers = #tpu.dot_dimension_numbers<[1], [0], [0], [1], [0, 0, 1, 1], [], []>} : vector<8x32xf32>, vector<32x32xf32>, vector<8x32xf32> -> vector<8x32xf32>
    %c5 = arith.constant 5 : index
    %c0_54 = arith.constant 0 : index
    %c0_55 = arith.constant 0 : index
    %91 = vector.load %arg8[%c5, %c0_54, %c0_55] : memref<11x32x32xf32, #tpu.memory_space<vmem>>, vector<1x32x32xf32>
    %92 = vector.shape_cast %91 : vector<1x32x32xf32> to vector<32x32xf32>
    %cst_56 = arith.constant dense<0.000000e+00> : vector<8x32xf32>
    %93 = tpu.matmul %72, %92, %cst_56 {dimension_numbers = #tpu.dot_dimension_numbers<[1], [0], [0], [1], [0, 0, 1, 1], [], []>} : vector<8x32xf32>, vector<32x32xf32>, vector<8x32xf32> -> vector<8x32xf32>
    %94 = arith.addf %90, %93 : vector<8x32xf32>
    %c3_57 = arith.constant 3 : index
    %c0_58 = arith.constant 0 : index
    %95 = vector.load %arg9[%c3_57, %c0_58] : memref<10x32xf32, #tpu.memory_space<vmem>>, vector<1x32xf32>
    %96 = vector.broadcast %95 : vector<1x32xf32> to vector<8x32xf32>
    %97 = arith.addf %94, %96 : vector<8x32xf32>
    %cst_59 = arith.constant 0.000000e+00 : f32
    %98 = vector.broadcast %cst_59 : f32 to vector<8x32xf32>
    %99 = arith.cmpf ogt, %97, %98 : vector<8x32xf32>
    %cst_60 = arith.constant 0.000000e+00 : f32
    %100 = vector.broadcast %cst_60 : f32 to vector<8x32xf32>
    %101 = arith.minimumf %97, %100 : vector<8x32xf32>
    %102 = math.exp %101 : vector<8x32xf32>
    %cst_61 = arith.constant 1.000000e+00 : f32
    %103 = vector.broadcast %cst_61 : f32 to vector<8x32xf32>
    %104 = arith.subf %102, %103 : vector<8x32xf32>
    %105 = arith.select %99, %97, %104 : vector<8x32xi1>, vector<8x32xf32>
    %c6 = arith.constant 6 : index
    %c0_62 = arith.constant 0 : index
    %c0_63 = arith.constant 0 : index
    %106 = vector.load %arg8[%c6, %c0_62, %c0_63] : memref<11x32x32xf32, #tpu.memory_space<vmem>>, vector<1x32x32xf32>
    %107 = vector.shape_cast %106 : vector<1x32x32xf32> to vector<32x32xf32>
    %cst_64 = arith.constant dense<0.000000e+00> : vector<8x32xf32>
    %108 = tpu.matmul %105, %107, %cst_64 {dimension_numbers = #tpu.dot_dimension_numbers<[1], [0], [0], [1], [0, 0, 1, 1], [], []>} : vector<8x32xf32>, vector<32x32xf32>, vector<8x32xf32> -> vector<8x32xf32>
    %c4_65 = arith.constant 4 : index
    %c0_66 = arith.constant 0 : index
    %109 = vector.load %arg9[%c4_65, %c0_66] : memref<10x32xf32, #tpu.memory_space<vmem>>, vector<1x32xf32>
    %110 = vector.broadcast %109 : vector<1x32xf32> to vector<8x32xf32>
    %111 = arith.addf %108, %110 : vector<8x32xf32>
    %cst_67 = arith.constant 0.000000e+00 : f32
    %112 = vector.broadcast %cst_67 : f32 to vector<8x32xf32>
    %113 = arith.cmpf ogt, %111, %112 : vector<8x32xf32>
    %cst_68 = arith.constant 0.000000e+00 : f32
    %114 = vector.broadcast %cst_68 : f32 to vector<8x32xf32>
    %115 = arith.minimumf %111, %114 : vector<8x32xf32>
    %116 = math.exp %115 : vector<8x32xf32>
    %cst_69 = arith.constant 1.000000e+00 : f32
    %117 = vector.broadcast %cst_69 : f32 to vector<8x32xf32>
    %118 = arith.subf %116, %117 : vector<8x32xf32>
    %119 = arith.select %113, %111, %118 : vector<8x32xi1>, vector<8x32xf32>
    %c7 = arith.constant 7 : index
    %c0_70 = arith.constant 0 : index
    %c0_71 = arith.constant 0 : index
    %120 = vector.load %arg8[%c7, %c0_70, %c0_71] : memref<11x32x32xf32, #tpu.memory_space<vmem>>, vector<1x32x32xf32>
    %121 = vector.shape_cast %120 : vector<1x32x32xf32> to vector<32x32xf32>
    %cst_72 = arith.constant dense<0.000000e+00> : vector<8x32xf32>
    %122 = tpu.matmul %119, %121, %cst_72 {dimension_numbers = #tpu.dot_dimension_numbers<[1], [0], [0], [1], [0, 0, 1, 1], [], []>} : vector<8x32xf32>, vector<32x32xf32>, vector<8x32xf32> -> vector<8x32xf32>
    %c5_73 = arith.constant 5 : index
    %c0_74 = arith.constant 0 : index
    %123 = vector.load %arg9[%c5_73, %c0_74] : memref<10x32xf32, #tpu.memory_space<vmem>>, vector<1x32xf32>
    %124 = vector.broadcast %123 : vector<1x32xf32> to vector<8x32xf32>
    %125 = arith.addf %122, %124 : vector<8x32xf32>
    %cst_75 = arith.constant 0.000000e+00 : f32
    %126 = vector.broadcast %cst_75 : f32 to vector<8x32xf32>
    %127 = arith.cmpf ogt, %125, %126 : vector<8x32xf32>
    %cst_76 = arith.constant 0.000000e+00 : f32
    %128 = vector.broadcast %cst_76 : f32 to vector<8x32xf32>
    %129 = arith.minimumf %125, %128 : vector<8x32xf32>
    %130 = math.exp %129 : vector<8x32xf32>
    %cst_77 = arith.constant 1.000000e+00 : f32
    %131 = vector.broadcast %cst_77 : f32 to vector<8x32xf32>
    %132 = arith.subf %130, %131 : vector<8x32xf32>
    %133 = arith.select %127, %125, %132 : vector<8x32xi1>, vector<8x32xf32>
    %c8 = arith.constant 8 : index
    %c0_78 = arith.constant 0 : index
    %c0_79 = arith.constant 0 : index
    %134 = vector.load %arg8[%c8, %c0_78, %c0_79] : memref<11x32x32xf32, #tpu.memory_space<vmem>>, vector<1x32x32xf32>
    %135 = vector.shape_cast %134 : vector<1x32x32xf32> to vector<32x32xf32>
    %cst_80 = arith.constant dense<0.000000e+00> : vector<8x32xf32>
    %136 = tpu.matmul %14, %135, %cst_80 {dimension_numbers = #tpu.dot_dimension_numbers<[1], [0], [0], [1], [0, 0, 1, 1], [], []>} : vector<8x32xf32>, vector<32x32xf32>, vector<8x32xf32> -> vector<8x32xf32>
    %c9 = arith.constant 9 : index
    %c0_81 = arith.constant 0 : index
    %c0_82 = arith.constant 0 : index
    %137 = vector.load %arg8[%c9, %c0_81, %c0_82] : memref<11x32x32xf32, #tpu.memory_space<vmem>>, vector<1x32x32xf32>
    %138 = vector.shape_cast %137 : vector<1x32x32xf32> to vector<32x32xf32>
    %cst_83 = arith.constant dense<0.000000e+00> : vector<8x32xf32>
    %139 = tpu.matmul %133, %138, %cst_83 {dimension_numbers = #tpu.dot_dimension_numbers<[1], [0], [0], [1], [0, 0, 1, 1], [], []>} : vector<8x32xf32>, vector<32x32xf32>, vector<8x32xf32> -> vector<8x32xf32>
    %140 = arith.addf %136, %139 : vector<8x32xf32>
    %c6_84 = arith.constant 6 : index
    %c0_85 = arith.constant 0 : index
    %141 = vector.load %arg9[%c6_84, %c0_85] : memref<10x32xf32, #tpu.memory_space<vmem>>, vector<1x32xf32>
    %142 = vector.broadcast %141 : vector<1x32xf32> to vector<8x32xf32>
    %143 = arith.addf %140, %142 : vector<8x32xf32>
    %cst_86 = arith.constant 0.000000e+00 : f32
    %144 = vector.broadcast %cst_86 : f32 to vector<8x32xf32>
    %145 = arith.cmpf ogt, %143, %144 : vector<8x32xf32>
    %cst_87 = arith.constant 0.000000e+00 : f32
    %146 = vector.broadcast %cst_87 : f32 to vector<8x32xf32>
    %147 = arith.minimumf %143, %146 : vector<8x32xf32>
    %148 = math.exp %147 : vector<8x32xf32>
    %cst_88 = arith.constant 1.000000e+00 : f32
    %149 = vector.broadcast %cst_88 : f32 to vector<8x32xf32>
    %150 = arith.subf %148, %149 : vector<8x32xf32>
    %151 = arith.select %145, %143, %150 : vector<8x32xi1>, vector<8x32xf32>
    %c10 = arith.constant 10 : index
    %c0_89 = arith.constant 0 : index
    %c0_90 = arith.constant 0 : index
    %152 = vector.load %arg8[%c10, %c0_89, %c0_90] : memref<11x32x32xf32, #tpu.memory_space<vmem>>, vector<1x32x32xf32>
    %153 = vector.shape_cast %152 : vector<1x32x32xf32> to vector<32x32xf32>
    %cst_91 = arith.constant dense<0.000000e+00> : vector<8x32xf32>
    %154 = tpu.matmul %151, %153, %cst_91 {dimension_numbers = #tpu.dot_dimension_numbers<[1], [0], [0], [1], [0, 0, 1, 1], [], []>} : vector<8x32xf32>, vector<32x32xf32>, vector<8x32xf32> -> vector<8x32xf32>
    %c7_92 = arith.constant 7 : index
    %c0_93 = arith.constant 0 : index
    %155 = vector.load %arg9[%c7_92, %c0_93] : memref<10x32xf32, #tpu.memory_space<vmem>>, vector<1x32xf32>
    %156 = vector.broadcast %155 : vector<1x32xf32> to vector<8x32xf32>
    %157 = arith.addf %154, %156 : vector<8x32xf32>
    %cst_94 = arith.constant 0.000000e+00 : f32
    %158 = vector.broadcast %cst_94 : f32 to vector<8x32xf32>
    %159 = arith.cmpf ogt, %157, %158 : vector<8x32xf32>
    %cst_95 = arith.constant 0.000000e+00 : f32
    %160 = vector.broadcast %cst_95 : f32 to vector<8x32xf32>
    %161 = arith.minimumf %157, %160 : vector<8x32xf32>
    %162 = math.exp %161 : vector<8x32xf32>
    %cst_96 = arith.constant 1.000000e+00 : f32
    %163 = vector.broadcast %cst_96 : f32 to vector<8x32xf32>
    %164 = arith.subf %162, %163 : vector<8x32xf32>
    %165 = arith.select %159, %157, %164 : vector<8x32xi1>, vector<8x32xf32>
    %c8_97 = arith.constant 8 : index
    %c0_98 = arith.constant 0 : index
    %166 = vector.load %arg9[%c8_97, %c0_98] : memref<10x32xf32, #tpu.memory_space<vmem>>, vector<1x32xf32>
    %167 = vector.broadcast %166 : vector<1x32xf32> to vector<8x32xf32>
    %168 = arith.mulf %165, %167 : vector<8x32xf32>
    %cst_99 = arith.constant dense<0.000000e+00> : vector<8xf32>
    %169 = vector.multi_reduction <add>, %168, %cst_99 [1] : vector<8x32xf32> to vector<8xf32>
    %170 = vector.shape_cast %169 : vector<8xf32> to vector<8x1xf32>
    %c9_100 = arith.constant 9 : index
    %c0_101 = arith.constant 0 : index
    %171 = vector.load %arg9[%c9_100, %c0_101] : memref<10x32xf32, #tpu.memory_space<vmem>>, vector<1x1xf32>
    %172 = vector.broadcast %171 : vector<1x1xf32> to vector<8x1xf32>
    %173 = arith.addf %170, %172 : vector<8x1xf32>
    %c0_102 = arith.constant 0 : index
    %c0_103 = arith.constant 0 : index
    %174 = vector.load %arg10[%c0_102, %c0_103] : memref<8x1xf32, #tpu.memory_space<vmem>>, vector<8x1xf32>
    tpu.vector_store %arg10[%c0_102, %c0_103], %173 {strides = array<i32>} : memref<8x1xf32, #tpu.memory_space<vmem>>, vector<8x1xf32>,
    return
  }
  func.func @transform_0(%arg0: i32) -> (i32, i32) {
    %c0_i32 = arith.constant 0 : i32
    %c0_i32_0 = arith.constant 0 : i32
    return %arg0, %c0_i32 : i32, i32
  }
  func.func @transform_1(%arg0: i32) -> (i32, i32) {
    %c0_i32 = arith.constant 0 : i32
    %c0_i32_0 = arith.constant 0 : i32
    return %arg0, %c0_i32 : i32, i32
  }
  func.func @transform_2(%arg0: i32) -> (i32, i32, i32) {
    %c0_i32 = arith.constant 0 : i32
    %c0_i32_0 = arith.constant 0 : i32
    %c0_i32_1 = arith.constant 0 : i32
    return %arg0, %c0_i32, %c0_i32_0 : i32, i32, i32
  }
  func.func @transform_3(%arg0: i32) -> (i32, i32) {
    %c0_i32 = arith.constant 0 : i32
    %c0_i32_0 = arith.constant 0 : i32
    return %arg0, %c0_i32 : i32, i32
  }
  func.func @transform_4(%arg0: i32) -> (i32, i32, i32) {
    %c0_i32 = arith.constant 0 : i32
    %c0_i32_0 = arith.constant 0 : i32
    %c0_i32_1 = arith.constant 0 : i32
    return %arg0, %c0_i32, %c0_i32_0 : i32, i32, i32
  }
  func.func @transform_5(%arg0: i32) -> (i32, i32) {
    %c0_i32 = arith.constant 0 : i32
    %c0_i32_0 = arith.constant 0 : i32
    return %arg0, %c0_i32 : i32, i32
  }
  func.func @transform_6(%arg0: i32) -> (i32, i32) {
    %c0_i32 = arith.constant 0 : i32
    %c0_i32_0 = arith.constant 0 : i32
    return %arg0, %c0_i32 : i32, i32
  }
  func.func @transform_7(%arg0: i32) -> (i32, i32, i32) {
    %c0_i32 = arith.constant 0 : i32
    %c0_i32_0 = arith.constant 0 : i32
    %c0_i32_1 = arith.constant 0 : i32
    %c0_i32_2 = arith.constant 0 : i32
    return %c0_i32, %c0_i32_0, %c0_i32_1 : i32, i32, i32
  }
  func.func @transform_8(%arg0: i32) -> (i32, i32) {
    %c0_i32 = arith.constant 0 : i32
    %c0_i32_0 = arith.constant 0 : i32
    %c0_i32_1 = arith.constant 0 : i32
    return %c0_i32, %c0_i32_0 : i32, i32
  }
  func.func @transform_9(%arg0: i32) -> (i32, i32) {
    %c0_i32 = arith.constant 0 : i32
    %c0_i32_0 = arith.constant 0 : i32
    return %arg0, %c0_i32 : i32, i32
  }
}

</mosaic_0001>

<llo_original>
// kernel: scenerec_forward.2
$region0: #{scenerec_forward.2}
  #allocation0 [shape = 'u32[]', space=smem, size = 0x4, offset = 0x4, fixed_abs, tag = 'smem constant byte address 0x4 - core index']
  #allocation1 [shape = 'u32[144,128]{1,0:T(1,128)}', space=vmem, size = 0x12000, scoped, tag = 'internal scratch']
  %s0 = inlined_call_operand.vmem [shape: f32[8,32], index: 0, kind: input, shape index: {}]
  %s1 = inlined_call_operand.vmem [shape: f32[8,4,32], index: 1, kind: input, shape index: {}]
  %s2 = inlined_call_operand.vmem [shape: f32[8,4], index: 2, kind: input, shape index: {}]
  %s3 = inlined_call_operand.vmem [shape: f32[8,4,32], index: 3, kind: input, shape index: {}]
  %s4 = inlined_call_operand.vmem [shape: f32[2,32,128], index: 4, kind: input, shape index: {}]
  %s5 = inlined_call_operand.vmem [shape: f32[1,128], index: 5, kind: input, shape index: {}]
  %s6 = inlined_call_operand.vmem [shape: f32[8,128], index: 6, kind: output, shape index: {}]
  %s7 = sld [smem:[#allocation0]]
  $region34: #{scenerec_forward.2} parent=0
    _
  %s9 = ssub.s32 1, %s7
  %s10 = scalar_select 0, %s9, %s7
  // Predicated region
  $region2: #{scenerec_forward.2} parent=0 // pred_check
    _
  $region3: #{scenerec_forward.2} parent=0 // pred_check_branch
    %12 = sbr.rel (0) target = $region5
  $region4: #{scenerec_forward.2} parent=0 // pred_region
    _
  $region5: #{scenerec_forward.2} parent=0 // pred_fallthru
    _
  // Predicated region
  $region6: #{scenerec_forward.2} parent=0 // pred_check
    _
  $region7: #{scenerec_forward.2} parent=0 // pred_check_branch
    %14 = sbr.rel (0) target = $region9
  $region8: #{scenerec_forward.2} parent=0 // pred_region
    _
  $region9: #{scenerec_forward.2} parent=0 // pred_fallthru
    _
  // Predicated region
  $region10: #{scenerec_forward.2} parent=0 // pred_check
    _
  $region11: #{scenerec_forward.2} parent=0 // pred_check_branch
    %16 = sbr.rel (0) target = $region13
  $region12: #{scenerec_forward.2} parent=0 // pred_region
    _
  $region13: #{scenerec_forward.2} parent=0 // pred_fallthru
    _
  // Predicated region
  $region14: #{scenerec_forward.2} parent=0 // pred_check
    _
  $region15: #{scenerec_forward.2} parent=0 // pred_check_branch
    %18 = sbr.rel (0) target = $region17
  $region16: #{scenerec_forward.2} parent=0 // pred_region
    _
  $region17: #{scenerec_forward.2} parent=0 // pred_fallthru
    _
  // Predicated region
  $region18: #{scenerec_forward.2} parent=0 // pred_check
    _
  $region19: #{scenerec_forward.2} parent=0 // pred_check_branch
    %20 = sbr.rel (0) target = $region21
  $region20: #{scenerec_forward.2} parent=0 // pred_region
    _
  $region21: #{scenerec_forward.2} parent=0 // pred_fallthru
    _
  // Predicated region
  $region22: #{scenerec_forward.2} parent=0 // pred_check
    _
  $region23: #{scenerec_forward.2} parent=0 // pred_check_branch
    %22 = sbr.rel (0) target = $region25
  $region24: #{scenerec_forward.2} parent=0 // pred_region
    _
  $region25: #{scenerec_forward.2} parent=0 // pred_fallthru
    _
  %v23 = vld [vmem:[%s0] sm:$0xff]
  %v24 = vld [vmem:[%s1] sm:$0xf]
  %v25 = vld [vmem:[%s1 + $0x4] sm:$0xf]
  %v26 = vld [vmem:[%s1 + $0x8] sm:$0xf]
  %v27 = vld [vmem:[%s1 + $0xc] sm:$0xf]
  %v28 = vld [vmem:[%s1 + $0x10] sm:$0xf]
  %v29 = vld [vmem:[%s1 + $0x14] sm:$0xf]
  %v30 = vld [vmem:[%s1 + $0x18] sm:$0xf]
  %v31 = vld [vmem:[%s1 + $0x1c] sm:$0xf]
  %v32 = vld [vmem:[%s2] sm:$0xff]
  %v33 = vld [vmem:[%s3] sm:$0xf]
  %v34 = vld [vmem:[%s3 + $0x4] sm:$0xf]
  %v35 = vld [vmem:[%s3 + $0x8] sm:$0xf]
  %v36 = vld [vmem:[%s3 + $0xc] sm:$0xf]
  %v37 = vld [vmem:[%s3 + $0x10] sm:$0xf]
  %v38 = vld [vmem:[%s3 + $0x14] sm:$0xf]
  %v39 = vld [vmem:[%s3 + $0x18] sm:$0xf]
  %v40 = vld [vmem:[%s3 + $0x1c] sm:$0xf]
  %v41 = vmul.f32 %v23, %v23
  %vm42 = vcmask 261120
  %v43 = vsel %vm42, %v41, 0.0
  %44 = vadd.xlane.f32.xlu0 %v43
  %v45 = vpop.xlane.xlu0 %44
  %v46 = vadd.f32 %v45, 1e-10
  %v47 = vrcp.pop %v46
  %v48 = vmul.f32 %v23, %v47
  %v49 = vmul.f32 %v24, %v24
  %v50 = vmul.f32 %v25, %v25
  %v51 = vmul.f32 %v26, %v26
  %v52 = vmul.f32 %v27, %v27
  %v53 = vmul.f32 %v28, %v28
  %v54 = vmul.f32 %v29, %v29
  %v55 = vmul.f32 %v30, %v30
  %v56 = vmul.f32 %v31, %v31
  %vm57 = vcmask 257024
  %v58 = vsel %vm57, %v49, 0.0
  %59 = vadd.xlane.f32.xlu0 %v58
  %v60 = vpop.xlane.xlu0 %59
  %v61 = vsel %vm57, %v50, 0.0
  %62 = vadd.xlane.f32.xlu0 %v61
  %v63 = vpop.xlane.xlu0 %62
  %v64 = vsel %vm57, %v51, 0.0
  %65 = vadd.xlane.f32.xlu0 %v64
  %v66 = vpop.xlane.xlu0 %65
  %v67 = vsel %vm57, %v52, 0.0
  %68 = vadd.xlane.f32.xlu0 %v67
  %v69 = vpop.xlane.xlu0 %68
  %v70 = vsel %vm57, %v53, 0.0
  %71 = vadd.xlane.f32.xlu0 %v70
  %v72 = vpop.xlane.xlu0 %71
  %v73 = vsel %vm57, %v54, 0.0
  %74 = vadd.xlane.f32.xlu0 %v73
  %v75 = vpop.xlane.xlu0 %74
  %v76 = vsel %vm57, %v55, 0.0
  %77 = vadd.xlane.f32.xlu0 %v76
  %v78 = vpop.xlane.xlu0 %77
  %v79 = vsel %vm57, %v56, 0.0
  %80 = vadd.xlane.f32.xlu0 %v79
  %v81 = vpop.xlane.xlu0 %80
  %v82 = vadd.f32 %v60, 1e-10
  %v83 = vadd.f32 %v63, 1e-10
  %v84 = vadd.f32 %v66, 1e-10
  %v85 = vadd.f32 %v69, 1e-10
  %v86 = vadd.f32 %v72, 1e-10
  %v87 = vadd.f32 %v75, 1e-10
  %v88 = vadd.f32 %v78, 1e-10
  %v89 = vadd.f32 %v81, 1e-10
  %v90 = vrcp.pop %v82
  %v91 = vrcp.pop %v83
  %v92 = vrcp.pop %v84
  %v93 = vrcp.pop %v85
  %v94 = vrcp.pop %v86
  %v95 = vrcp.pop %v87
  %v96 = vrcp.pop %v88
  %v97 = vrcp.pop %v89
  %v98 = vmul.f32 %v24, %v90
  %v99 = vmul.f32 %v25, %v91
  %v100 = vmul.f32 %v26, %v92
  %v101 = vmul.f32 %v27, %v93
  %v102 = vmul.f32 %v28, %v94
  %v103 = vmul.f32 %v29, %v95
  %v104 = vmul.f32 %v30, %v96
  %v105 = vmul.f32 %v31, %v97
  %v107 = vcombine.high %v48, %v48
  %v109 = vunpack.c.l.s4 1966171168
  %v110 = vunpack.c.0.s8 %v109
  %v111 = vlaneseq
  %v112 = vshrl.u32 %v111, 7
  %v113 = vsub.s32 %v110, %v112
  %v114 = vrot.slane %v48, %v113
  %v116 = vunpack.c.l.s4 1966171168
  %v117 = vunpack.c.0.s8 %v116
  %v118 = vlaneseq
  %v119 = vshrl.u32 %v118, 7
  %v120 = vsub.s32 %v117, %v119
  %v121 = vrot.slane %v107, %v120
  %v122 = vcombine.high %v114, %v114
  %v123 = vcombine.high %v121, %v121
  %v125 = vunpack.c.l.s4 1966171168
  %v126 = vunpack.c.0.s8 %v125
  %v127 = vlaneseq
  %v128 = vshrl.u32 %v127, 7
  %v129 = vsub.s32 %v126, %v128
  %v130 = vrot.slane %v114, %v129
  %v132 = vunpack.c.l.s4 1966171168
  %v133 = vunpack.c.0.s8 %v132
  %v134 = vlaneseq
  %v135 = vshrl.u32 %v134, 7
  %v136 = vsub.s32 %v133, %v135
  %v137 = vrot.slane %v121, %v136
  %v139 = vunpack.c.l.s4 1966171168
  %v140 = vunpack.c.0.s8 %v139
  %v141 = vlaneseq
  %v142 = vshrl.u32 %v141, 7
  %v143 = vsub.s32 %v140, %v142
  %v144 = vrot.slane %v122, %v143
  %v146 = vunpack.c.l.s4 1966171168
  %v147 = vunpack.c.0.s8 %v146
  %v148 = vlaneseq
  %v149 = vshrl.u32 %v148, 7
  %v150 = vsub.s32 %v147, %v149
  %v151 = vrot.slane %v123, %v150
  %v152 = vcombine.high %v130, %v130
  %v153 = vcombine.high %v137, %v137
  %v154 = vcombine.high %v144, %v144
  %v155 = vcombine.high %v151, %v151
  %v156 = vlaneseq
  %v157 = vshrl.u32 %v156, 7
  %v158 = vsub.s32 0, %v157
  %v159 = vrot.slane %v130, %v158
  %v160 = vlaneseq
  %v161 = vshrl.u32 %v160, 7
  %v162 = vsub.s32 0, %v161
  %v163 = vrot.slane %v144, %v162
  %v164 = vlaneseq
  %v165 = vshrl.u32 %v164, 7
  %v166 = vsub.s32 0, %v165
  %v167 = vrot.slane %v152, %v166
  %v168 = vlaneseq
  %v169 = vshrl.u32 %v168, 7
  %v170 = vsub.s32 0, %v169
  %v171 = vrot.slane %v154, %v170
  %v172 = vlaneseq
  %v173 = vshrl.u32 %v172, 7
  %v174 = vsub.s32 0, %v173
  %v175 = vrot.slane %v137, %v174
  %v176 = vlaneseq
  %v177 = vshrl.u32 %v176, 7
  %v178 = vsub.s32 0, %v177
  %v179 = vrot.slane %v151, %v178
  %v180 = vlaneseq
  %v181 = vshrl.u32 %v180, 7
  %v182 = vsub.s32 0, %v181
  %v183 = vrot.slane %v153, %v182
  %v184 = vlaneseq
  %v185 = vshrl.u32 %v184, 7
  %v186 = vsub.s32 0, %v185
  %v187 = vrot.slane %v155, %v186
  %v196 = vmul.f32 %v159, %v98
  %v197 = vmul.f32 %v163, %v99
  %v198 = vmul.f32 %v167, %v100
  %v199 = vmul.f32 %v171, %v101
  %v200 = vmul.f32 %v175, %v102
  %v201 = vmul.f32 %v179, %v103
  %v202 = vmul.f32 %v183, %v104
  %v203 = vmul.f32 %v187, %v105
  %v204 = vsel %vm57, %v196, 0.0
  %205 = vadd.xlane.f32.xlu0 %v204
  %v206 = vpop.xlane.xlu0 %205
  %v207 = vsel %vm57, %v197, 0.0
  %208 = vadd.xlane.f32.xlu0 %v207
  %v209 = vpop.xlane.xlu0 %208
  %v210 = vsel %vm57, %v198, 0.0
  %211 = vadd.xlane.f32.xlu0 %v210
  %v212 = vpop.xlane.xlu0 %211
  %v213 = vsel %vm57, %v199, 0.0
  %214 = vadd.xlane.f32.xlu0 %v213
  %v215 = vpop.xlane.xlu0 %214
  %v216 = vsel %vm57, %v200, 0.0
  %217 = vadd.xlane.f32.xlu0 %v216
  %v218 = vpop.xlane.xlu0 %217
  %v219 = vsel %vm57, %v201, 0.0
  %220 = vadd.xlane.f32.xlu0 %v219
  %v221 = vpop.xlane.xlu0 %220
  %v222 = vsel %vm57, %v202, 0.0
  %223 = vadd.xlane.f32.xlu0 %v222
  %v224 = vpop.xlane.xlu0 %223
  %v225 = vsel %vm57, %v203, 0.0
  %226 = vadd.xlane.f32.xlu0 %v225
  %v227 = vpop.xlane.xlu0 %226
  %v228 = vmin.f32 %v206, 60.0
  %v229 = vmin.f32 %v209, 60.0
  %v230 = vmin.f32 %v212, 60.0
  %v231 = vmin.f32 %v215, 60.0
  %v232 = vmin.f32 %v218, 60.0
  %v233 = vmin.f32 %v221, 60.0
  %v234 = vmin.f32 %v224, 60.0
  %v235 = vmin.f32 %v227, 60.0
  %v236 = vmul.f32 %v228, 1.442695
  %v237 = vpow.pop %v236
  %v238 = vmul.f32 %v229, 1.442695
  %v239 = vpow.pop %v238
  %v240 = vmul.f32 %v230, 1.442695
  %v241 = vpow.pop %v240
  %v242 = vmul.f32 %v231, 1.442695
  %v243 = vpow.pop %v242
  %v244 = vmul.f32 %v232, 1.442695
  %v245 = vpow.pop %v244
  %v246 = vmul.f32 %v233, 1.442695
  %v247 = vpow.pop %v246
  %v248 = vmul.f32 %v234, 1.442695
  %v249 = vpow.pop %v248
  %v250 = vmul.f32 %v235, 1.442695
  %v251 = vpow.pop %v250
  %v253 = vlaneseq
  %v254 = vshrl.u32 %v253, 7
  %v255 = vsub.s32 0, %v254
  %v256 = vrot.slane %v32, %v255
  %258 = vbcast.lane.b32.xlu0 %v256, 256
  %v259 = vpop.permute.xlu0 %258
  %v260 = vlaneseq
  %v261 = vshrl.u32 %v260, 7
  %v262 = vsub.s32 1, %v261
  %v263 = vrot.slane %v32, %v262
  %265 = vbcast.lane.b32.xlu0 %v263, 256
  %v266 = vpop.permute.xlu0 %265
  %v267 = vlaneseq
  %v268 = vshrl.u32 %v267, 7
  %v269 = vsub.s32 2, %v268
  %v270 = vrot.slane %v32, %v269
  %272 = vbcast.lane.b32.xlu0 %v270, 256
  %v273 = vpop.permute.xlu0 %272
  %v274 = vlaneseq
  %v275 = vshrl.u32 %v274, 7
  %v276 = vsub.s32 3, %v275
  %v277 = vrot.slane %v32, %v276
  %279 = vbcast.lane.b32.xlu0 %v277, 256
  %v280 = vpop.permute.xlu0 %279
  %v281 = vlaneseq
  %v282 = vshrl.u32 %v281, 7
  %v283 = vsub.s32 4, %v282
  %v284 = vrot.slane %v32, %v283
  %286 = vbcast.lane.b32.xlu0 %v284, 256
  %v287 = vpop.permute.xlu0 %286
  %v288 = vlaneseq
  %v289 = vshrl.u32 %v288, 7
  %v290 = vsub.s32 5, %v289
  %v291 = vrot.slane %v32, %v290
  %293 = vbcast.lane.b32.xlu0 %v291, 256
  %v294 = vpop.permute.xlu0 %293
  %v295 = vlaneseq
  %v296 = vshrl.u32 %v295, 7
  %v297 = vsub.s32 6, %v296
  %v298 = vrot.slane %v32, %v297
  %300 = vbcast.lane.b32.xlu0 %v298, 256
  %v301 = vpop.permute.xlu0 %300
  %v302 = vlaneseq
  %v303 = vshrl.u32 %v302, 7
  %v304 = vsub.s32 7, %v303
  %v305 = vrot.slane %v32, %v304
  %307 = vbcast.lane.b32.xlu0 %v305, 256
  %v308 = vpop.permute.xlu0 %307
  %v317 = vmul.f32 %v237, %v259
  %v318 = vmul.f32 %v239, %v266
  %v319 = vmul.f32 %v241, %v273
  %v320 = vmul.f32 %v243, %v280
  %v321 = vmul.f32 %v245, %v287
  %v322 = vmul.f32 %v247, %v294
  %v323 = vmul.f32 %v249, %v301
  %v324 = vmul.f32 %v251, %v308
  %333 = vset.pattern.permute.xlu0 0
  %334 = vperm.xlu0 %333, %v317
  %v335 = vpop.permute.xlu0 %334
  %336 = vset.pattern.permute.xlu0 0
  %337 = vperm.xlu0 %336, %v318
  %v338 = vpop.permute.xlu0 %337
  %339 = vset.pattern.permute.xlu0 0
  %340 = vperm.xlu0 %339, %v319
  %v341 = vpop.permute.xlu0 %340
  %342 = vset.pattern.permute.xlu0 0
  %343 = vperm.xlu0 %342, %v320
  %v344 = vpop.permute.xlu0 %343
  %345 = vset.pattern.permute.xlu0 0
  %346 = vperm.xlu0 %345, %v321
  %v347 = vpop.permute.xlu0 %346
  %348 = vset.pattern.permute.xlu0 0
  %349 = vperm.xlu0 %348, %v322
  %v350 = vpop.permute.xlu0 %349
  %351 = vset.pattern.permute.xlu0 0
  %352 = vperm.xlu0 %351, %v323
  %v353 = vpop.permute.xlu0 %352
  %354 = vset.pattern.permute.xlu0 0
  %355 = vperm.xlu0 %354, %v324
  %v356 = vpop.permute.xlu0 %355
  %v357 = vlaneseq
  %v358 = vand.u32 %v357, 127
  %v359 = vlaneseq
  %v360 = vshrl.u32 %v359, 7
  %v361 = vsub.s32 %v358, %v360
  %v362 = vrot.slane %v335, %v361
  %v363 = vlaneseq
  %v364 = vshrl.u32 %v363, 7
  %v365 = vsub.s32 %v358, %v364
  %v366 = vrot.slane %v338, %v365
  %v367 = vlaneseq
  %v368 = vshrl.u32 %v367, 7
  %v369 = vsub.s32 %v358, %v368
  %v370 = vrot.slane %v341, %v369
  %v371 = vlaneseq
  %v372 = vshrl.u32 %v371, 7
  %v373 = vsub.s32 %v358, %v372
  %v374 = vrot.slane %v344, %v373
  %v375 = vlaneseq
  %v376 = vshrl.u32 %v375, 7
  %v377 = vsub.s32 %v358, %v376
  %v378 = vrot.slane %v347, %v377
  %v379 = vlaneseq
  %v380 = vshrl.u32 %v379, 7
  %v381 = vsub.s32 %v358, %v380
  %v382 = vrot.slane %v350, %v381
  %v383 = vlaneseq
  %v384 = vshrl.u32 %v383, 7
  %v385 = vsub.s32 %v358, %v384
  %v386 = vrot.slane %v353, %v385
  %v387 = vlaneseq
  %v388 = vshrl.u32 %v387, 7
  %v389 = vsub.s32 %v358, %v388
  %v390 = vrot.slane %v356, %v389
  %vm391 = vcmask 1041409
  %v392 = vsel %vm391, %v366, %v362
  %vm393 = vcmask 1042434
  %v394 = vsel %vm393, %v370, %v392
  %vm395 = vcmask 1043459
  %v396 = vsel %vm395, %v374, %v394
  %vm397 = vcmask 1044484
  %v398 = vsel %vm397, %v378, %v396
  %vm399 = vcmask 1045509
  %v400 = vsel %vm399, %v382, %v398
  %vm401 = vcmask 1046534
  %v402 = vsel %vm401, %v386, %v400
  %vm403 = vcmask 1047559
  %v404 = vsel %vm403, %v390, %v402
  %vm406 = vcmask 31744
  %v407 = vsel %vm406, %v404, 0.0
  %408 = vadd.xlane.f32.xlu0 %v407
  %v409 = vpop.xlane.xlu0 %408
  %v410 = vadd.f32 %v409, 1e-10
  %v411 = vrcp.pop %v410
  %v413 = vlaneseq
  %v414 = vshrl.u32 %v413, 7
  %v415 = vsub.s32 0, %v414
  %v416 = vrot.slane %v411, %v415
  %v417 = vlaneseq
  %v418 = vshrl.u32 %v417, 7
  %v419 = vsub.s32 1, %v418
  %v420 = vrot.slane %v411, %v419
  %v421 = vlaneseq
  %v422 = vshrl.u32 %v421, 7
  %v423 = vsub.s32 2, %v422
  %v424 = vrot.slane %v411, %v423
  %v425 = vlaneseq
  %v426 = vshrl.u32 %v425, 7
  %v427 = vsub.s32 3, %v426
  %v428 = vrot.slane %v411, %v427
  %v429 = vlaneseq
  %v430 = vshrl.u32 %v429, 7
  %v431 = vsub.s32 4, %v430
  %v432 = vrot.slane %v411, %v431
  %v433 = vlaneseq
  %v434 = vshrl.u32 %v433, 7
  %v435 = vsub.s32 5, %v434
  %v436 = vrot.slane %v411, %v435
  %v437 = vlaneseq
  %v438 = vshrl.u32 %v437, 7
  %v439 = vsub.s32 6, %v438
  %v440 = vrot.slane %v411, %v439
  %v441 = vlaneseq
  %v442 = vshrl.u32 %v441, 7
  %v443 = vsub.s32 7, %v442
  %v444 = vrot.slane %v411, %v443
  %v453 = vmul.f32 %v317, %v416
  %v454 = vmul.f32 %v318, %v420
  %v455 = vmul.f32 %v319, %v424
  %v456 = vmul.f32 %v320, %v428
  %v457 = vmul.f32 %v321, %v432
  %v458 = vmul.f32 %v322, %v436
  %v459 = vmul.f32 %v323, %v440
  %v460 = vmul.f32 %v324, %v444
  %462 = vset.pattern.permute.xlu0 0
  %463 = vperm.xlu0 %462, %v453
  %v464 = vpop.permute.xlu0 %463
  %467 = vset.pattern.permute.xlu0 0
  %468 = vperm.xlu0 %467, %v454
  %v469 = vpop.permute.xlu0 %468
  %472 = vset.pattern.permute.xlu0 0
  %473 = vperm.xlu0 %472, %v455
  %v474 = vpop.permute.xlu0 %473
  %477 = vset.pattern.permute.xlu0 0
  %478 = vperm.xlu0 %477, %v456
  %v479 = vpop.permute.xlu0 %478
  %482 = vset.pattern.permute.xlu0 0
  %483 = vperm.xlu0 %482, %v457
  %v484 = vpop.permute.xlu0 %483
  %487 = vset.pattern.permute.xlu0 0
  %488 = vperm.xlu0 %487, %v458
  %v489 = vpop.permute.xlu0 %488
  %492 = vset.pattern.permute.xlu0 0
  %493 = vperm.xlu0 %492, %v459
  %v494 = vpop.permute.xlu0 %493
  %497 = vset.pattern.permute.xlu0 0
  %498 = vperm.xlu0 %497, %v460
  %v499 = vpop.permute.xlu0 %498
  %v501 = vmul.f32 %v464, %v33
  %v502 = vmul.f32 %v469, %v34
  %v503 = vmul.f32 %v474, %v35
  %v504 = vmul.f32 %v479, %v36
  %v505 = vmul.f32 %v484, %v37
  %v506 = vmul.f32 %v489, %v38
  %v507 = vmul.f32 %v494, %v39
  %v508 = vmul.f32 %v499, %v40
  %v509 = vsel %vm57, %v501, 0.0
  %v510 = vrot.slane %v509, 4
  %v511 = vadd.f32 %v509, %v510
  %v512 = vrot.slane %v511, 2
  %v513 = vadd.f32 %v511, %v512
  %v514 = vrot.slane %v513, 1
  %v515 = vadd.f32 %v513, %v514
  %v516 = vsel %vm57, %v502, 0.0
  %v517 = vrot.slane %v516, 4
  %v518 = vadd.f32 %v516, %v517
  %v519 = vrot.slane %v518, 2
  %v520 = vadd.f32 %v518, %v519
  %v521 = vrot.slane %v520, 1
  %v522 = vadd.f32 %v520, %v521
  %v523 = vsel %vm57, %v503, 0.0
  %v524 = vrot.slane %v523, 4
  %v525 = vadd.f32 %v523, %v524
  %v526 = vrot.slane %v525, 2
  %v527 = vadd.f32 %v525, %v526
  %v528 = vrot.slane %v527, 1
  %v529 = vadd.f32 %v527, %v528
  %v530 = vsel %vm57, %v504, 0.0
  %v531 = vrot.slane %v530, 4
  %v532 = vadd.f32 %v530, %v531
  %v533 = vrot.slane %v532, 2
  %v534 = vadd.f32 %v532, %v533
  %v535 = vrot.slane %v534, 1
  %v536 = vadd.f32 %v534, %v535
  %v537 = vsel %vm57, %v505, 0.0
  %v538 = vrot.slane %v537, 4
  %v539 = vadd.f32 %v537, %v538
  %v540 = vrot.slane %v539, 2
  %v541 = vadd.f32 %v539, %v540
  %v542 = vrot.slane %v541, 1
  %v543 = vadd.f32 %v541, %v542
  %v544 = vsel %vm57, %v506, 0.0
  %v545 = vrot.slane %v544, 4
  %v546 = vadd.f32 %v544, %v545
  %v547 = vrot.slane %v546, 2
  %v548 = vadd.f32 %v546, %v547
  %v549 = vrot.slane %v548, 1
  %v550 = vadd.f32 %v548, %v549
  %v551 = vsel %vm57, %v507, 0.0
  %v552 = vrot.slane %v551, 4
  %v553 = vadd.f32 %v551, %v552
  %v554 = vrot.slane %v553, 2
  %v555 = vadd.f32 %v553, %v554
  %v556 = vrot.slane %v555, 1
  %v557 = vadd.f32 %v555, %v556
  %v558 = vsel %vm57, %v508, 0.0
  %v559 = vrot.slane %v558, 4
  %v560 = vadd.f32 %v558, %v559
  %v561 = vrot.slane %v560, 2
  %v562 = vadd.f32 %v560, %v561
  %v563 = vrot.slane %v562, 1
  %v564 = vadd.f32 %v562, %v563
  %v565 = vld [vmem:[%s4] sm:$0xff]
  %v566 = vld [vmem:[%s4 + $0x8] sm:$0xff]
  %v567 = vld [vmem:[%s4 + $0x10] sm:$0xff]
  %v568 = vld [vmem:[%s4 + $0x18] sm:$0xff]
  %s569 = scalar_lea.vmem %s4, 32
  %v570 = vld [vmem:[%s569] sm:$0xff]
  %v571 = vld [vmem:[%s569 + $0x8] sm:$0xff]
  %v572 = vld [vmem:[%s569 + $0x10] sm:$0xff]
  %v573 = vld [vmem:[%s569 + $0x18] sm:$0xff]
  %v582 = vsel %vm391, %v522, %v515
  %v583 = vsel %vm393, %v529, %v582
  %v584 = vsel %vm395, %v536, %v583
  %v585 = vsel %vm397, %v543, %v584
  %v586 = vsel %vm399, %v550, %v585
  %v587 = vsel %vm401, %v557, %v586
  %v588 = vsel %vm403, %v564, %v587
  %v589 = vsel %vm42, %v588, 0
  %591 = vmatprep.subr.mxu0 0.0
  %592 = vmatpush1.msra.mxu0 %v570
  %593 = vmatprep.subr.mxu0 0.0
  %594 = vmatpush1.msra.mxu0 %v571
  %595 = vmatprep.subr.mxu0 0.0
  %596 = vmatpush1.msra.mxu0 %v572
  %597 = vmatprep.subr.mxu0 0.0
  %598 = vmatpush1.msra.mxu0 %v573
  %599 = vmatprep.subr.mxu0 0.0
  %600 = vmatpush1.msra.mxu0 0.0
  %601 = vmatprep.subr.mxu0 0.0
  %602 = vmatpush1.msra.mxu0 0.0
  %603 = vmatprep.subr.mxu0 0.0
  %604 = vmatpush1.msra.mxu0 0.0
  %605 = vmatprep.subr.mxu0 0.0
  %606 = vmatpush1.msra.mxu0 0.0
  %607 = vmatprep.subr.mxu0 0.0
  %608 = vmatpush1.msra.mxu0 0.0
  %609 = vmatprep.subr.mxu0 0.0
  %610 = vmatpush1.msra.mxu0 0.0
  %611 = vmatprep.subr.mxu0 0.0
  %612 = vmatpush1.msra.mxu0 0.0
  %613 = vmatprep.subr.mxu0 0.0
  %614 = vmatpush1.msra.mxu0 0.0
  %615 = vmatprep.subr.mxu0 0.0
  %616 = vmatpush1.msra.mxu0 0.0
  %617 = vmatprep.subr.mxu0 0.0
  %618 = vmatpush1.msra.mxu0 0.0
  %619 = vmatprep.subr.mxu0 0.0
  %620 = vmatpush1.msra.mxu0 0.0
  %621 = vmatprep.subr.mxu0 0.0
  %622 = vmatpush1.msra.mxu0 0.0
  %623 = vmatprep.subr.mxu0 0.0
  %624 = vmatpush1.msra.mxu0 0.0
  %625 = vmatprep.subr.mxu0 0.0
  %626 = vmatpush1.msra.mxu0 0.0
  %627 = vmatprep.subr.mxu0 0.0
  %628 = vmatpush1.msra.mxu0 0.0
  %629 = vmatprep.subr.mxu0 0.0
  %630 = vmatpush1.msra.mxu0 0.0
  %631 = vmatprep.subr.mxu0 0.0
  %632 = vmatpush1.msra.mxu0 0.0
  %633 = vmatprep.subr.mxu0 0.0
  %634 = vmatpush1.msra.mxu0 0.0
  %635 = vmatprep.subr.mxu0 0.0
  %636 = vmatpush1.msra.mxu0 0.0
  %637 = vmatprep.subr.mxu0 0.0
  %638 = vmatpush1.msra.mxu0 0.0
  %639 = vmatprep.subr.mxu0 0.0
  %640 = vmatpush1.msra.mxu0 0.0
  %641 = vmatprep.subr.mxu0 0.0
  %642 = vmatpush1.msra.mxu0 0.0
  %643 = vmatprep.subr.mxu0 0.0
  %644 = vmatpush1.msra.mxu0 0.0
  %645 = vmatprep.subr.mxu0 0.0
  %646 = vmatpush1.msra.mxu0 0.0
  %647 = vmatprep.subr.mxu0 0.0
  %648 = vmatpush1.msra.mxu0 0.0
  %649 = vmatprep.subr.mxu0 0.0
  %650 = vmatpush1.msra.mxu0 0.0
  %651 = vmatprep.subr.mxu0 0.0
  %652 = vmatpush1.msra.mxu0 0.0
  %653 = vmatprep.subr.mxu0 0.0
  %654 = vmatpush1.msra.mxu0 0.0
  %655 = vmatprep.mubr.f32.mxu0 0.0
  %656 = vmatmul.mubr.f32.gmra.mrb[0].mxu0 %v589
  %v657 = vpop.f32.mrb[0].mxu0
  %v658 = vadd.f32 0.0, %v657
  %v659 = vpop.f32.mrb[0].mxu0
  %660 = vdwg.mxu0
  %v662 = vsel %vm42, %v23, 0
  %664 = vmatprep.subr.mxu0 0.0
  %665 = vmatpush1.msra.mxu0 %v565
  %666 = vmatprep.subr.mxu0 0.0
  %667 = vmatpush1.msra.mxu0 %v566
  %668 = vmatprep.subr.mxu0 0.0
  %669 = vmatpush1.msra.mxu0 %v567
  %670 = vmatprep.subr.mxu0 0.0
  %671 = vmatpush1.msra.mxu0 %v568
  %672 = vmatprep.subr.mxu0 0.0
  %673 = vmatpush1.msra.mxu0 0.0
  %674 = vmatprep.subr.mxu0 0.0
  %675 = vmatpush1.msra.mxu0 0.0
  %676 = vmatprep.subr.mxu0 0.0
  %677 = vmatpush1.msra.mxu0 0.0
  %678 = vmatprep.subr.mxu0 0.0
  %679 = vmatpush1.msra.mxu0 0.0
  %680 = vmatprep.subr.mxu0 0.0
  %681 = vmatpush1.msra.mxu0 0.0
  %682 = vmatprep.subr.mxu0 0.0
  %683 = vmatpush1.msra.mxu0 0.0
  %684 = vmatprep.subr.mxu0 0.0
  %685 = vmatpush1.msra.mxu0 0.0
  %686 = vmatprep.subr.mxu0 0.0
  %687 = vmatpush1.msra.mxu0 0.0
  %688 = vmatprep.subr.mxu0 0.0
  %689 = vmatpush1.msra.mxu0 0.0
  %690 = vmatprep.subr.mxu0 0.0
  %691 = vmatpush1.msra.mxu0 0.0
  %692 = vmatprep.subr.mxu0 0.0
  %693 = vmatpush1.msra.mxu0 0.0
  %694 = vmatprep.subr.mxu0 0.0
  %695 = vmatpush1.msra.mxu0 0.0
  %696 = vmatprep.subr.mxu0 0.0
  %697 = vmatpush1.msra.mxu0 0.0
  %698 = vmatprep.subr.mxu0 0.0
  %699 = vmatpush1.msra.mxu0 0.0
  %700 = vmatprep.subr.mxu0 0.0
  %701 = vmatpush1.msra.mxu0 0.0
  %702 = vmatprep.subr.mxu0 0.0
  %703 = vmatpush1.msra.mxu0 0.0
  %704 = vmatprep.subr.mxu0 0.0
  %705 = vmatpush1.msra.mxu0 0.0
  %706 = vmatprep.subr.mxu0 0.0
  %707 = vmatpush1.msra.mxu0 0.0
  %708 = vmatprep.subr.mxu0 0.0
  %709 = vmatpush1.msra.mxu0 0.0
  %710 = vmatprep.subr.mxu0 0.0
  %711 = vmatpush1.msra.mxu0 0.0
  %712 = vmatprep.subr.mxu0 0.0
  %713 = vmatpush1.msra.mxu0 0.0
  %714 = vmatprep.subr.mxu0 0.0
  %715 = vmatpush1.msra.mxu0 0.0
  %716 = vmatprep.subr.mxu0 0.0
  %717 = vmatpush1.msra.mxu0 0.0
  %718 = vmatprep.subr.mxu0 0.0
  %719 = vmatpush1.msra.mxu0 0.0
  %720 = vmatprep.subr.mxu0 0.0
  %721 = vmatpush1.msra.mxu0 0.0
  %722 = vmatprep.subr.mxu0 0.0
  %723 = vmatpush1.msra.mxu0 0.0
  %724 = vmatprep.subr.mxu0 0.0
  %725 = vmatpush1.msra.mxu0 0.0
  %726 = vmatprep.subr.mxu0 0.0
  %727 = vmatpush1.msra.mxu0 0.0
  %728 = vmatprep.mubr.f32.mxu0 0.0
  %729 = vmatmul.mubr.f32.gmra.mrb[0].mxu0 %v662
  %v730 = vpop.f32.mrb[0].mxu0
  %v731 = vadd.f32 %v658, %v730
  %v732 = vpop.f32.mrb[0].mxu0
  %733 = vdwg.mxu0
  %v734 = vld [vmem:[%s5] sm:$0x1]
  %v736 = vlaneseq
  %v737 = vshrl.u32 %v736, 7
  %v738 = vsub.s32 0, %v737
  %v739 = vrot.slane %v734, %v738
  %v741 = vadd.f32 %v731, %v739
  %vm742 = vcmp.gt.f32.partialorder %v741, 0.0
  %v743 = vmin.f32 %v741, 0.0
  %v744 = vmul.f32 %v743, 1.442695
  %v745 = vpow.pop %v744
  %v746 = vsub.f32 %v745, 1.0
  %v747 = vsel %vm742, %v741, %v746
  %748 = vst [vmem:[%s6] sm:$0xff] %v747
  // Predicated region
  $region26: #{scenerec_forward.2} parent=0 // pred_check
    _
  $region27: #{scenerec_forward.2} parent=0 // pred_check_branch
    %750 = sbr.rel (0) target = $region29
  $region28: #{scenerec_forward.2} parent=0 // pred_region
    _
  $region29: #{scenerec_forward.2} parent=0 // pred_fallthru
    _
  // Predicated region
  $region30: #{scenerec_forward.2} parent=0 // pred_check
    _
  $region31: #{scenerec_forward.2} parent=0 // pred_check_branch
    %752 = sbr.rel (0) target = $region33
  $region32: #{scenerec_forward.2} parent=0 // pred_region
    _
  $region33: #{scenerec_forward.2} parent=0 // pred_fallthru
    _

// kernel: scenerec_forward.3
$region0: #{scenerec_forward.3}
  #allocation0 [shape = 'u32[]', space=smem, size = 0x4, offset = 0x4, fixed_abs, tag = 'smem constant byte address 0x4 - core index']
  #allocation1 [shape = 'u32[144,128]{1,0:T(1,128)}', space=vmem, size = 0x12000, scoped, tag = 'internal scratch']
  %s0 = inlined_call_operand.vmem [shape: f32[8,32], index: 0, kind: input, shape index: {}]
  %s1 = inlined_call_operand.vmem [shape: f32[8,32], index: 1, kind: input, shape index: {}]
  %s2 = inlined_call_operand.vmem [shape: f32[8,5,32], index: 2, kind: input, shape index: {}]
  %s3 = inlined_call_operand.vmem [shape: f32[8,5], index: 3, kind: input, shape index: {}]
  %s4 = inlined_call_operand.vmem [shape: f32[8,5,32], index: 4, kind: input, shape index: {}]
  %s5 = inlined_call_operand.vmem [shape: f32[8,32], index: 5, kind: input, shape index: {}]
  %s6 = inlined_call_operand.vmem [shape: f32[8,32], index: 6, kind: input, shape index: {}]
  %s7 = inlined_call_operand.vmem [shape: f32[11,32,32], index: 7, kind: input, shape index: {}]
  %s8 = inlined_call_operand.vmem [shape: f32[10,32], index: 8, kind: input, shape index: {}]
  %s9 = inlined_call_operand.vmem [shape: f32[8,1], index: 9, kind: output, shape index: {}]
  %s10 = sld [smem:[#allocation0]]
  $region46: #{scenerec_forward.3} parent=0
    _
  %s12 = ssub.s32 1, %s10
  %s13 = scalar_select 0, %s12, %s10
  // Predicated region
  $region2: #{scenerec_forward.3} parent=0 // pred_check
    _
  $region3: #{scenerec_forward.3} parent=0 // pred_check_branch
    %15 = sbr.rel (0) target = $region5
  $region4: #{scenerec_forward.3} parent=0 // pred_region
    _
  $region5: #{scenerec_forward.3} parent=0 // pred_fallthru
    _
  // Predicated region
  $region6: #{scenerec_forward.3} parent=0 // pred_check
    _
  $region7: #{scenerec_forward.3} parent=0 // pred_check_branch
    %17 = sbr.rel (0) target = $region9
  $region8: #{scenerec_forward.3} parent=0 // pred_region
    _
  $region9: #{scenerec_forward.3} parent=0 // pred_fallthru
    _
  // Predicated region
  $region10: #{scenerec_forward.3} parent=0 // pred_check
    _
  $region11: #{scenerec_forward.3} parent=0 // pred_check_branch
    %19 = sbr.rel (0) target = $region13
  $region12: #{scenerec_forward.3} parent=0 // pred_region
    _
  $region13: #{scenerec_forward.3} parent=0 // pred_fallthru
    _
  // Predicated region
  $region14: #{scenerec_forward.3} parent=0 // pred_check
    _
  $region15: #{scenerec_forward.3} parent=0 // pred_check_branch
    %21 = sbr.rel (0) target = $region17
  $region16: #{scenerec_forward.3} parent=0 // pred_region
    _
  $region17: #{scenerec_forward.3} parent=0 // pred_fallthru
    _
  // Predicated region
  $region18: #{scenerec_forward.3} parent=0 // pred_check
    _
  $region19: #{scenerec_forward.3} parent=0 // pred_check_branch
    %23 = sbr.rel (0) target = $region21
  $region20: #{scenerec_forward.3} parent=0 // pred_region
    _
  $region21: #{scenerec_forward.3} parent=0 // pred_fallthru
    _
  // Predicated region
  $region22: #{scenerec_forward.3} parent=0 // pred_check
    _
  $region23: #{scenerec_forward.3} parent=0 // pred_check_branch
    %25 = sbr.rel (0) target = $region25
  $region24: #{scenerec_forward.3} parent=0 // pred_region
    _
  $region25: #{scenerec_forward.3} parent=0 // pred_fallthru
    _
  // Predicated region
  $region26: #{scenerec_forward.3} parent=0 // pred_check
    _
  $region27: #{scenerec_forward.3} parent=0 // pred_check_branch
    %27 = sbr.rel (0) target = $region29
  $region28: #{scenerec_forward.3} parent=0 // pred_region
    _
  $region29: #{scenerec_forward.3} parent=0 // pred_fallthru
    _
  // Predicated region
  $region30: #{scenerec_forward.3} parent=0 // pred_check
    _
  $region31: #{scenerec_forward.3} parent=0 // pred_check_branch
    %29 = sbr.rel (0) target = $region33
  $region32: #{scenerec_forward.3} parent=0 // pred_region
    _
  $region33: #{scenerec_forward.3} parent=0 // pred_fallthru
    _
  // Predicated region
  $region34: #{scenerec_forward.3} parent=0 // pred_check
    _
  $region35: #{scenerec_forward.3} parent=0 // pred_check_branch
    %31 = sbr.rel (0) target = $region37
  $region36: #{scenerec_forward.3} parent=0 // pred_region
    _
  $region37: #{scenerec_forward.3} parent=0 // pred_fallthru
    _
  %v32 = vld [vmem:[%s0] sm:$0xff]
  %v33 = vld [vmem:[%s7] sm:$0xff]
  %v34 = vld [vmem:[%s7 + $0x8] sm:$0xff]
  %v35 = vld [vmem:[%s7 + $0x10] sm:$0xff]
  %v36 = vld [vmem:[%s7 + $0x18] sm:$0xff]
  %v37 = vld [vmem:[%s8] sm:$0x1]
  %v38 = vlaneseq
  %v39 = vshrl.u32 %v38, 7
  %v40 = vsub.s32 0, %v39
  %v41 = vrot.slane %v37, %v40
  %vm42 = vcmask 261120
  %v44 = vsel %vm42, %v32, 0
  %46 = vmatprep.subr.mxu0 0.0
  %47 = vmatpush1.msra.mxu0 %v33
  %48 = vmatprep.subr.mxu0 0.0
  %49 = vmatpush1.msra.mxu0 %v34
  %50 = vmatprep.subr.mxu0 0.0
  %51 = vmatpush1.msra.mxu0 %v35
  %52 = vmatprep.subr.mxu0 0.0
  %53 = vmatpush1.msra.mxu0 %v36
  %54 = vmatprep.subr.mxu0 0.0
  %55 = vmatpush1.msra.mxu0 0.0
  %56 = vmatprep.subr.mxu0 0.0
  %57 = vmatpush1.msra.mxu0 0.0
  %58 = vmatprep.subr.mxu0 0.0
  %59 = vmatpush1.msra.mxu0 0.0
  %60 = vmatprep.subr.mxu0 0.0
  %61 = vmatpush1.msra.mxu0 0.0
  %62 = vmatprep.subr.mxu0 0.0
  %63 = vmatpush1.msra.mxu0 0.0
  %64 = vmatprep.subr.mxu0 0.0
  %65 = vmatpush1.msra.mxu0 0.0
  %66 = vmatprep.subr.mxu0 0.0
  %67 = vmatpush1.msra.mxu0 0.0
  %68 = vmatprep.subr.mxu0 0.0
  %69 = vmatpush1.msra.mxu0 0.0
  %70 = vmatprep.subr.mxu0 0.0
  %71 = vmatpush1.msra.mxu0 0.0
  %72 = vmatprep.subr.mxu0 0.0
  %73 = vmatpush1.msra.mxu0 0.0
  %74 = vmatprep.subr.mxu0 0.0
  %75 = vmatpush1.msra.mxu0 0.0
  %76 = vmatprep.subr.mxu0 0.0
  %77 = vmatpush1.msra.mxu0 0.0
  %78 = vmatprep.subr.mxu0 0.0
  %79 = vmatpush1.msra.mxu0 0.0
  %80 = vmatprep.subr.mxu0 0.0
  %81 = vmatpush1.msra.mxu0 0.0
  %82 = vmatprep.subr.mxu0 0.0
  %83 = vmatpush1.msra.mxu0 0.0
  %84 = vmatprep.subr.mxu0 0.0
  %85 = vmatpush1.msra.mxu0 0.0
  %86 = vmatprep.subr.mxu0 0.0
  %87 = vmatpush1.msra.mxu0 0.0
  %88 = vmatprep.subr.mxu0 0.0
  %89 = vmatpush1.msra.mxu0 0.0
  %90 = vmatprep.subr.mxu0 0.0
  %91 = vmatpush1.msra.mxu0 0.0
  %92 = vmatprep.subr.mxu0 0.0
  %93 = vmatpush1.msra.mxu0 0.0
  %94 = vmatprep.subr.mxu0 0.0
  %95 = vmatpush1.msra.mxu0 0.0
  %96 = vmatprep.subr.mxu0 0.0
  %97 = vmatpush1.msra.mxu0 0.0
  %98 = vmatprep.subr.mxu0 0.0
  %99 = vmatpush1.msra.mxu0 0.0
  %100 = vmatprep.subr.mxu0 0.0
  %101 = vmatpush1.msra.mxu0 0.0
  %102 = vmatprep.subr.mxu0 0.0
  %103 = vmatpush1.msra.mxu0 0.0
  %104 = vmatprep.subr.mxu0 0.0
  %105 = vmatpush1.msra.mxu0 0.0
  %106 = vmatprep.subr.mxu0 0.0
  %107 = vmatpush1.msra.mxu0 0.0
  %108 = vmatprep.subr.mxu0 0.0
  %109 = vmatpush1.msra.mxu0 0.0
  %110 = vmatprep.mubr.f32.mxu0 0.0
  %111 = vmatmul.mubr.f32.gmra.mrb[0].mxu0 %v44
  %v112 = vpop.f32.mrb[0].mxu0
  %v113 = vadd.f32 %v41, %v112
  %v114 = vpop.f32.mrb[0].mxu0
  %115 = vdwg.mxu0
  %vm116 = vcmp.gt.f32.partialorder %v113, 0.0
  %v117 = vmin.f32 %v113, 0.0
  %v118 = vmul.f32 %v117, 1.442695
  %v119 = vpow.pop %v118
  %v120 = vsub.f32 %v119, 1.0
  %v121 = vsel %vm116, %v113, %v120
  %v122 = vld [vmem:[%s1] sm:$0xff]
  %v123 = vld [vmem:[%s2] sm:$0x1f]
  %v124 = vld [vmem:[%s2 + $0x8] sm:$0x1f]
  %v125 = vld [vmem:[%s2 + $0x10] sm:$0x1f]
  %v126 = vld [vmem:[%s2 + $0x18] sm:$0x1f]
  %v127 = vld [vmem:[%s2 + $0x20] sm:$0x1f]
  %v128 = vld [vmem:[%s2 + $0x28] sm:$0x1f]
  %v129 = vld [vmem:[%s2 + $0x30] sm:$0x1f]
  %v130 = vld [vmem:[%s2 + $0x38] sm:$0x1f]
  %v131 = vld [vmem:[%s3] sm:$0xff]
  %v132 = vld [vmem:[%s4] sm:$0x1f]
  %v133 = vld [vmem:[%s4 + $0x8] sm:$0x1f]
  %v134 = vld [vmem:[%s4 + $0x10] sm:$0x1f]
  %v135 = vld [vmem:[%s4 + $0x18] sm:$0x1f]
  %v136 = vld [vmem:[%s4 + $0x20] sm:$0x1f]
  %v137 = vld [vmem:[%s4 + $0x28] sm:$0x1f]
  %v138 = vld [vmem:[%s4 + $0x30] sm:$0x1f]
  %v139 = vld [vmem:[%s4 + $0x38] sm:$0x1f]
  %v140 = vmul.f32 %v122, %v122
  %v141 = vsel %vm42, %v140, 0.0
  %142 = vadd.xlane.f32.xlu0 %v141
  %v143 = vpop.xlane.xlu0 %142
  %v144 = vadd.f32 %v143, 1e-10
  %v145 = vrcp.pop %v144
  %v146 = vmul.f32 %v122, %v145
  %v147 = vmul.f32 %v123, %v123
  %v148 = vmul.f32 %v124, %v124
  %v149 = vmul.f32 %v125, %v125
  %v150 = vmul.f32 %v126, %v126
  %v151 = vmul.f32 %v127, %v127
  %v152 = vmul.f32 %v128, %v128
  %v153 = vmul.f32 %v129, %v129
  %v154 = vmul.f32 %v130, %v130
  %vm155 = vcmask 258048
  %v156 = vsel %vm155, %v147, 0.0
  %157 = vadd.xlane.f32.xlu0 %v156
  %v158 = vpop.xlane.xlu0 %157
  %v159 = vsel %vm155, %v148, 0.0
  %160 = vadd.xlane.f32.xlu0 %v159
  %v161 = vpop.xlane.xlu0 %160
  %v162 = vsel %vm155, %v149, 0.0
  %163 = vadd.xlane.f32.xlu0 %v162
  %v164 = vpop.xlane.xlu0 %163
  %v165 = vsel %vm155, %v150, 0.0
  %166 = vadd.xlane.f32.xlu0 %v165
  %v167 = vpop.xlane.xlu0 %166
  %v168 = vsel %vm155, %v151, 0.0
  %169 = vadd.xlane.f32.xlu0 %v168
  %v170 = vpop.xlane.xlu0 %169
  %v171 = vsel %vm155, %v152, 0.0
  %172 = vadd.xlane.f32.xlu0 %v171
  %v173 = vpop.xlane.xlu0 %172
  %v174 = vsel %vm155, %v153, 0.0
  %175 = vadd.xlane.f32.xlu0 %v174
  %v176 = vpop.xlane.xlu0 %175
  %v177 = vsel %vm155, %v154, 0.0
  %178 = vadd.xlane.f32.xlu0 %v177
  %v179 = vpop.xlane.xlu0 %178
  %v180 = vadd.f32 %v158, 1e-10
  %v181 = vadd.f32 %v161, 1e-10
  %v182 = vadd.f32 %v164, 1e-10
  %v183 = vadd.f32 %v167, 1e-10
  %v184 = vadd.f32 %v170, 1e-10
  %v185 = vadd.f32 %v173, 1e-10
  %v186 = vadd.f32 %v176, 1e-10
  %v187 = vadd.f32 %v179, 1e-10
  %v188 = vrcp.pop %v180
  %v189 = vrcp.pop %v181
  %v190 = vrcp.pop %v182
  %v191 = vrcp.pop %v183
  %v192 = vrcp.pop %v184
  %v193 = vrcp.pop %v185
  %v194 = vrcp.pop %v186
  %v195 = vrcp.pop %v187
  %v196 = vmul.f32 %v123, %v188
  %v197 = vmul.f32 %v124, %v189
  %v198 = vmul.f32 %v125, %v190
  %v199 = vmul.f32 %v126, %v191
  %v200 = vmul.f32 %v127, %v192
  %v201 = vmul.f32 %v128, %v193
  %v202 = vmul.f32 %v129, %v194
  %v203 = vmul.f32 %v130, %v195
  %v205 = vcombine.high %v146, %v146
  %v207 = vunpack.c.l.s4 1966171168
  %v208 = vunpack.c.0.s8 %v207
  %v209 = vlaneseq
  %v210 = vshrl.u32 %v209, 7
  %v211 = vsub.s32 %v208, %v210
  %v212 = vrot.slane %v146, %v211
  %v214 = vunpack.c.l.s4 1966171168
  %v215 = vunpack.c.0.s8 %v214
  %v216 = vlaneseq
  %v217 = vshrl.u32 %v216, 7
  %v218 = vsub.s32 %v215, %v217
  %v219 = vrot.slane %v205, %v218
  %v220 = vcombine.high %v212, %v212
  %v221 = vcombine.high %v219, %v219
  %v223 = vunpack.c.l.s4 1966171168
  %v224 = vunpack.c.0.s8 %v223
  %v225 = vlaneseq
  %v226 = vshrl.u32 %v225, 7
  %v227 = vsub.s32 %v224, %v226
  %v228 = vrot.slane %v212, %v227
  %v230 = vunpack.c.l.s4 1966171168
  %v231 = vunpack.c.0.s8 %v230
  %v232 = vlaneseq
  %v233 = vshrl.u32 %v232, 7
  %v234 = vsub.s32 %v231, %v233
  %v235 = vrot.slane %v219, %v234
  %v237 = vunpack.c.l.s4 1966171168
  %v238 = vunpack.c.0.s8 %v237
  %v239 = vlaneseq
  %v240 = vshrl.u32 %v239, 7
  %v241 = vsub.s32 %v238, %v240
  %v242 = vrot.slane %v220, %v241
  %v244 = vunpack.c.l.s4 1966171168
  %v245 = vunpack.c.0.s8 %v244
  %v246 = vlaneseq
  %v247 = vshrl.u32 %v246, 7
  %v248 = vsub.s32 %v245, %v247
  %v249 = vrot.slane %v221, %v248
  %v250 = vcombine.high %v228, %v228
  %v251 = vcombine.high %v235, %v235
  %v252 = vcombine.high %v242, %v242
  %v253 = vcombine.high %v249, %v249
  %v254 = vlaneseq
  %v255 = vshrl.u32 %v254, 7
  %v256 = vsub.s32 0, %v255
  %v257 = vrot.slane %v228, %v256
  %v258 = vlaneseq
  %v259 = vshrl.u32 %v258, 7
  %v260 = vsub.s32 0, %v259
  %v261 = vrot.slane %v242, %v260
  %v262 = vlaneseq
  %v263 = vshrl.u32 %v262, 7
  %v264 = vsub.s32 0, %v263
  %v265 = vrot.slane %v250, %v264
  %v266 = vlaneseq
  %v267 = vshrl.u32 %v266, 7
  %v268 = vsub.s32 0, %v267
  %v269 = vrot.slane %v252, %v268
  %v270 = vlaneseq
  %v271 = vshrl.u32 %v270, 7
  %v272 = vsub.s32 0, %v271
  %v273 = vrot.slane %v235, %v272
  %v274 = vlaneseq
  %v275 = vshrl.u32 %v274, 7
  %v276 = vsub.s32 0, %v275
  %v277 = vrot.slane %v249, %v276
  %v278 = vlaneseq
  %v279 = vshrl.u32 %v278, 7
  %v280 = vsub.s32 0, %v279
  %v281 = vrot.slane %v251, %v280
  %v282 = vlaneseq
  %v283 = vshrl.u32 %v282, 7
  %v284 = vsub.s32 0, %v283
  %v285 = vrot.slane %v253, %v284
  %v294 = vmul.f32 %v257, %v196
  %v295 = vmul.f32 %v261, %v197
  %v296 = vmul.f32 %v265, %v198
  %v297 = vmul.f32 %v269, %v199
  %v298 = vmul.f32 %v273, %v200
  %v299 = vmul.f32 %v277, %v201
  %v300 = vmul.f32 %v281, %v202
  %v301 = vmul.f32 %v285, %v203
  %v302 = vsel %vm155, %v294, 0.0
  %303 = vadd.xlane.f32.xlu0 %v302
  %v304 = vpop.xlane.xlu0 %303
  %v305 = vsel %vm155, %v295, 0.0
  %306 = vadd.xlane.f32.xlu0 %v305
  %v307 = vpop.xlane.xlu0 %306
  %v308 = vsel %vm155, %v296, 0.0
  %309 = vadd.xlane.f32.xlu0 %v308
  %v310 = vpop.xlane.xlu0 %309
  %v311 = vsel %vm155, %v297, 0.0
  %312 = vadd.xlane.f32.xlu0 %v311
  %v313 = vpop.xlane.xlu0 %312
  %v314 = vsel %vm155, %v298, 0.0
  %315 = vadd.xlane.f32.xlu0 %v314
  %v316 = vpop.xlane.xlu0 %315
  %v317 = vsel %vm155, %v299, 0.0
  %318 = vadd.xlane.f32.xlu0 %v317
  %v319 = vpop.xlane.xlu0 %318
  %v320 = vsel %vm155, %v300, 0.0
  %321 = vadd.xlane.f32.xlu0 %v320
  %v322 = vpop.xlane.xlu0 %321
  %v323 = vsel %vm155, %v301, 0.0
  %324 = vadd.xlane.f32.xlu0 %v323
  %v325 = vpop.xlane.xlu0 %324
  %v326 = vmin.f32 %v304, 60.0
  %v327 = vmin.f32 %v307, 60.0
  %v328 = vmin.f32 %v310, 60.0
  %v329 = vmin.f32 %v313, 60.0
  %v330 = vmin.f32 %v316, 60.0
  %v331 = vmin.f32 %v319, 60.0
  %v332 = vmin.f32 %v322, 60.0
  %v333 = vmin.f32 %v325, 60.0
  %v334 = vmul.f32 %v326, 1.442695
  %v335 = vpow.pop %v334
  %v336 = vmul.f32 %v327, 1.442695
  %v337 = vpow.pop %v336
  %v338 = vmul.f32 %v328, 1.442695
  %v339 = vpow.pop %v338
  %v340 = vmul.f32 %v329, 1.442695
  %v341 = vpow.pop %v340
  %v342 = vmul.f32 %v330, 1.442695
  %v343 = vpow.pop %v342
  %v344 = vmul.f32 %v331, 1.442695
  %v345 = vpow.pop %v344
  %v346 = vmul.f32 %v332, 1.442695
  %v347 = vpow.pop %v346
  %v348 = vmul.f32 %v333, 1.442695
  %v349 = vpow.pop %v348
  %v351 = vlaneseq
  %v352 = vshrl.u32 %v351, 7
  %v353 = vsub.s32 0, %v352
  %v354 = vrot.slane %v131, %v353
  %356 = vbcast.lane.b32.xlu0 %v354, 256
  %v357 = vpop.permute.xlu0 %356
  %v358 = vlaneseq
  %v359 = vshrl.u32 %v358, 7
  %v360 = vsub.s32 1, %v359
  %v361 = vrot.slane %v131, %v360
  %363 = vbcast.lane.b32.xlu0 %v361, 256
  %v364 = vpop.permute.xlu0 %363
  %v365 = vlaneseq
  %v366 = vshrl.u32 %v365, 7
  %v367 = vsub.s32 2, %v366
  %v368 = vrot.slane %v131, %v367
  %370 = vbcast.lane.b32.xlu0 %v368, 256
  %v371 = vpop.permute.xlu0 %370
  %v372 = vlaneseq
  %v373 = vshrl.u32 %v372, 7
  %v374 = vsub.s32 3, %v373
  %v375 = vrot.slane %v131, %v374
  %377 = vbcast.lane.b32.xlu0 %v375, 256
  %v378 = vpop.permute.xlu0 %377
  %v379 = vlaneseq
  %v380 = vshrl.u32 %v379, 7
  %v381 = vsub.s32 4, %v380
  %v382 = vrot.slane %v131, %v381
  %384 = vbcast.lane.b32.xlu0 %v382, 256
  %v385 = vpop.permute.xlu0 %384
  %v386 = vlaneseq
  %v387 = vshrl.u32 %v386, 7
  %v388 = vsub.s32 5, %v387
  %v389 = vrot.slane %v131, %v388
  %391 = vbcast.lane.b32.xlu0 %v389, 256
  %v392 = vpop.permute.xlu0 %391
  %v393 = vlaneseq
  %v394 = vshrl.u32 %v393, 7
  %v395 = vsub.s32 6, %v394
  %v396 = vrot.slane %v131, %v395
  %398 = vbcast.lane.b32.xlu0 %v396, 256
  %v399 = vpop.permute.xlu0 %398
  %v400 = vlaneseq
  %v401 = vshrl.u32 %v400, 7
  %v402 = vsub.s32 7, %v401
  %v403 = vrot.slane %v131, %v402
  %405 = vbcast.lane.b32.xlu0 %v403, 256
  %v406 = vpop.permute.xlu0 %405
  %v415 = vmul.f32 %v335, %v357
  %v416 = vmul.f32 %v337, %v364
  %v417 = vmul.f32 %v339, %v371
  %v418 = vmul.f32 %v341, %v378
  %v419 = vmul.f32 %v343, %v385
  %v420 = vmul.f32 %v345, %v392
  %v421 = vmul.f32 %v347, %v399
  %v422 = vmul.f32 %v349, %v406
  %431 = vset.pattern.permute.xlu0 0
  %432 = vperm.xlu0 %431, %v415
  %v433 = vpop.permute.xlu0 %432
  %434 = vset.pattern.permute.xlu0 0
  %435 = vperm.xlu0 %434, %v416
  %v436 = vpop.permute.xlu0 %435
  %437 = vset.pattern.permute.xlu0 0
  %438 = vperm.xlu0 %437, %v417
  %v439 = vpop.permute.xlu0 %438
  %440 = vset.pattern.permute.xlu0 0
  %441 = vperm.xlu0 %440, %v418
  %v442 = vpop.permute.xlu0 %441
  %443 = vset.pattern.permute.xlu0 0
  %444 = vperm.xlu0 %443, %v419
  %v445 = vpop.permute.xlu0 %444
  %446 = vset.pattern.permute.xlu0 0
  %447 = vperm.xlu0 %446, %v420
  %v448 = vpop.permute.xlu0 %447
  %449 = vset.pattern.permute.xlu0 0
  %450 = vperm.xlu0 %449, %v421
  %v451 = vpop.permute.xlu0 %450
  %452 = vset.pattern.permute.xlu0 0
  %453 = vperm.xlu0 %452, %v422
  %v454 = vpop.permute.xlu0 %453
  %v455 = vlaneseq
  %v456 = vand.u32 %v455, 127
  %v457 = vlaneseq
  %v458 = vshrl.u32 %v457, 7
  %v459 = vsub.s32 %v456, %v458
  %v460 = vrot.slane %v433, %v459
  %v461 = vlaneseq
  %v462 = vshrl.u32 %v461, 7
  %v463 = vsub.s32 %v456, %v462
  %v464 = vrot.slane %v436, %v463
  %v465 = vlaneseq
  %v466 = vshrl.u32 %v465, 7
  %v467 = vsub.s32 %v456, %v466
  %v468 = vrot.slane %v439, %v467
  %v469 = vlaneseq
  %v470 = vshrl.u32 %v469, 7
  %v471 = vsub.s32 %v456, %v470
  %v472 = vrot.slane %v442, %v471
  %v473 = vlaneseq
  %v474 = vshrl.u32 %v473, 7
  %v475 = vsub.s32 %v456, %v474
  %v476 = vrot.slane %v445, %v475
  %v477 = vlaneseq
  %v478 = vshrl.u32 %v477, 7
  %v479 = vsub.s32 %v456, %v478
  %v480 = vrot.slane %v448, %v479
  %v481 = vlaneseq
  %v482 = vshrl.u32 %v481, 7
  %v483 = vsub.s32 %v456, %v482
  %v484 = vrot.slane %v451, %v483
  %v485 = vlaneseq
  %v486 = vshrl.u32 %v485, 7
  %v487 = vsub.s32 %v456, %v486
  %v488 = vrot.slane %v454, %v487
  %vm489 = vcmask 1041409
  %v490 = vsel %vm489, %v464, %v460
  %vm491 = vcmask 1042434
  %v492 = vsel %vm491, %v468, %v490
  %vm493 = vcmask 1043459
  %v494 = vsel %vm493, %v472, %v492
  %vm495 = vcmask 1044484
  %v496 = vsel %vm495, %v476, %v494
  %vm497 = vcmask 1045509
  %v498 = vsel %vm497, %v480, %v496
  %vm499 = vcmask 1046534
  %v500 = vsel %vm499, %v484, %v498
  %vm501 = vcmask 1047559
  %v502 = vsel %vm501, %v488, %v500
  %vm504 = vcmask 39936
  %v505 = vsel %vm504, %v502, 0.0
  %506 = vadd.xlane.f32.xlu0 %v505
  %v507 = vpop.xlane.xlu0 %506
  %v508 = vadd.f32 %v507, 1e-10
  %v509 = vrcp.pop %v508
  %v511 = vlaneseq
  %v512 = vshrl.u32 %v511, 7
  %v513 = vsub.s32 0, %v512
  %v514 = vrot.slane %v509, %v513
  %v515 = vlaneseq
  %v516 = vshrl.u32 %v515, 7
  %v517 = vsub.s32 1, %v516
  %v518 = vrot.slane %v509, %v517
  %v519 = vlaneseq
  %v520 = vshrl.u32 %v519, 7
  %v521 = vsub.s32 2, %v520
  %v522 = vrot.slane %v509, %v521
  %v523 = vlaneseq
  %v524 = vshrl.u32 %v523, 7
  %v525 = vsub.s32 3, %v524
  %v526 = vrot.slane %v509, %v525
  %v527 = vlaneseq
  %v528 = vshrl.u32 %v527, 7
  %v529 = vsub.s32 4, %v528
  %v530 = vrot.slane %v509, %v529
  %v531 = vlaneseq
  %v532 = vshrl.u32 %v531, 7
  %v533 = vsub.s32 5, %v532
  %v534 = vrot.slane %v509, %v533
  %v535 = vlaneseq
  %v536 = vshrl.u32 %v535, 7
  %v537 = vsub.s32 6, %v536
  %v538 = vrot.slane %v509, %v537
  %v539 = vlaneseq
  %v540 = vshrl.u32 %v539, 7
  %v541 = vsub.s32 7, %v540
  %v542 = vrot.slane %v509, %v541
  %v551 = vmul.f32 %v415, %v514
  %v552 = vmul.f32 %v416, %v518
  %v553 = vmul.f32 %v417, %v522
  %v554 = vmul.f32 %v418, %v526
  %v555 = vmul.f32 %v419, %v530
  %v556 = vmul.f32 %v420, %v534
  %v557 = vmul.f32 %v421, %v538
  %v558 = vmul.f32 %v422, %v542
  %560 = vset.pattern.permute.xlu0 0
  %561 = vperm.xlu0 %560, %v551
  %v562 = vpop.permute.xlu0 %561
  %565 = vset.pattern.permute.xlu0 0
  %566 = vperm.xlu0 %565, %v552
  %v567 = vpop.permute.xlu0 %566
  %570 = vset.pattern.permute.xlu0 0
  %571 = vperm.xlu0 %570, %v553
  %v572 = vpop.permute.xlu0 %571
  %575 = vset.pattern.permute.xlu0 0
  %576 = vperm.xlu0 %575, %v554
  %v577 = vpop.permute.xlu0 %576
  %580 = vset.pattern.permute.xlu0 0
  %581 = vperm.xlu0 %580, %v555
  %v582 = vpop.permute.xlu0 %581
  %585 = vset.pattern.permute.xlu0 0
  %586 = vperm.xlu0 %585, %v556
  %v587 = vpop.permute.xlu0 %586
  %590 = vset.pattern.permute.xlu0 0
  %591 = vperm.xlu0 %590, %v557
  %v592 = vpop.permute.xlu0 %591
  %595 = vset.pattern.permute.xlu0 0
  %596 = vperm.xlu0 %595, %v558
  %v597 = vpop.permute.xlu0 %596
  %v599 = vmul.f32 %v562, %v132
  %v600 = vmul.f32 %v567, %v133
  %v601 = vmul.f32 %v572, %v134
  %v602 = vmul.f32 %v577, %v135
  %v603 = vmul.f32 %v582, %v136
  %v604 = vmul.f32 %v587, %v137
  %v605 = vmul.f32 %v592, %v138
  %v606 = vmul.f32 %v597, %v139
  %v607 = vsel %vm155, %v599, 0.0
  %v608 = vrot.slane %v607, 4
  %v609 = vadd.f32 %v607, %v608
  %v610 = vrot.slane %v609, 2
  %v611 = vadd.f32 %v609, %v610
  %v612 = vrot.slane %v611, 1
  %v613 = vadd.f32 %v611, %v612
  %v614 = vsel %vm155, %v600, 0.0
  %v615 = vrot.slane %v614, 4
  %v616 = vadd.f32 %v614, %v615
  %v617 = vrot.slane %v616, 2
  %v618 = vadd.f32 %v616, %v617
  %v619 = vrot.slane %v618, 1
  %v620 = vadd.f32 %v618, %v619
  %v621 = vsel %vm155, %v601, 0.0
  %v622 = vrot.slane %v621, 4
  %v623 = vadd.f32 %v621, %v622
  %v624 = vrot.slane %v623, 2
  %v625 = vadd.f32 %v623, %v624
  %v626 = vrot.slane %v625, 1
  %v627 = vadd.f32 %v625, %v626
  %v628 = vsel %vm155, %v602, 0.0
  %v629 = vrot.slane %v628, 4
  %v630 = vadd.f32 %v628, %v629
  %v631 = vrot.slane %v630, 2
  %v632 = vadd.f32 %v630, %v631
  %v633 = vrot.slane %v632, 1
  %v634 = vadd.f32 %v632, %v633
  %v635 = vsel %vm155, %v603, 0.0
  %v636 = vrot.slane %v635, 4
  %v637 = vadd.f32 %v635, %v636
  %v638 = vrot.slane %v637, 2
  %v639 = vadd.f32 %v637, %v638
  %v640 = vrot.slane %v639, 1
  %v641 = vadd.f32 %v639, %v640
  %v642 = vsel %vm155, %v604, 0.0
  %v643 = vrot.slane %v642, 4
  %v644 = vadd.f32 %v642, %v643
  %v645 = vrot.slane %v644, 2
  %v646 = vadd.f32 %v644, %v645
  %v647 = vrot.slane %v646, 1
  %v648 = vadd.f32 %v646, %v647
  %v649 = vsel %vm155, %v605, 0.0
  %v650 = vrot.slane %v649, 4
  %v651 = vadd.f32 %v649, %v650
  %v652 = vrot.slane %v651, 2
  %v653 = vadd.f32 %v651, %v652
  %v654 = vrot.slane %v653, 1
  %v655 = vadd.f32 %v653, %v654
  %v656 = vsel %vm155, %v606, 0.0
  %v657 = vrot.slane %v656, 4
  %v658 = vadd.f32 %v656, %v657
  %v659 = vrot.slane %v658, 2
  %v660 = vadd.f32 %v658, %v659
  %v661 = vrot.slane %v660, 1
  %v662 = vadd.f32 %v660, %v661
  %v663 = vld [vmem:[%s5] sm:$0xff]
  %s664 = scalar_lea.vmem %s7, 32
  %v665 = vld [vmem:[%s664] sm:$0xff]
  %v666 = vld [vmem:[%s664 + $0x8] sm:$0xff]
  %v667 = vld [vmem:[%s664 + $0x10] sm:$0xff]
  %v668 = vld [vmem:[%s664 + $0x18] sm:$0xff]
  %s669 = scalar_lea.vmem %s7, 64
  %v670 = vld [vmem:[%s669] sm:$0xff]
  %v671 = vld [vmem:[%s669 + $0x8] sm:$0xff]
  %v672 = vld [vmem:[%s669 + $0x10] sm:$0xff]
  %v673 = vld [vmem:[%s669 + $0x18] sm:$0xff]
  %v682 = vsel %vm489, %v620, %v613
  %v683 = vsel %vm491, %v627, %v682
  %v684 = vsel %vm493, %v634, %v683
  %v685 = vsel %vm495, %v641, %v684
  %v686 = vsel %vm497, %v648, %v685
  %v687 = vsel %vm499, %v655, %v686
  %v688 = vsel %vm501, %v662, %v687
  %v689 = vsel %vm42, %v688, 0
  %691 = vmatprep.subr.mxu0 0.0
  %692 = vmatpush1.msra.mxu0 %v670
  %693 = vmatprep.subr.mxu0 0.0
  %694 = vmatpush1.msra.mxu0 %v671
  %695 = vmatprep.subr.mxu0 0.0
  %696 = vmatpush1.msra.mxu0 %v672
  %697 = vmatprep.subr.mxu0 0.0
  %698 = vmatpush1.msra.mxu0 %v673
  %699 = vmatprep.subr.mxu0 0.0
  %700 = vmatpush1.msra.mxu0 0.0
  %701 = vmatprep.subr.mxu0 0.0
  %702 = vmatpush1.msra.mxu0 0.0
  %703 = vmatprep.subr.mxu0 0.0
  %704 = vmatpush1.msra.mxu0 0.0
  %705 = vmatprep.subr.mxu0 0.0
  %706 = vmatpush1.msra.mxu0 0.0
  %707 = vmatprep.subr.mxu0 0.0
  %708 = vmatpush1.msra.mxu0 0.0
  %709 = vmatprep.subr.mxu0 0.0
  %710 = vmatpush1.msra.mxu0 0.0
  %711 = vmatprep.subr.mxu0 0.0
  %712 = vmatpush1.msra.mxu0 0.0
  %713 = vmatprep.subr.mxu0 0.0
  %714 = vmatpush1.msra.mxu0 0.0
  %715 = vmatprep.subr.mxu0 0.0
  %716 = vmatpush1.msra.mxu0 0.0
  %717 = vmatprep.subr.mxu0 0.0
  %718 = vmatpush1.msra.mxu0 0.0
  %719 = vmatprep.subr.mxu0 0.0
  %720 = vmatpush1.msra.mxu0 0.0
  %721 = vmatprep.subr.mxu0 0.0
  %722 = vmatpush1.msra.mxu0 0.0
  %723 = vmatprep.subr.mxu0 0.0
  %724 = vmatpush1.msra.mxu0 0.0
  %725 = vmatprep.subr.mxu0 0.0
  %726 = vmatpush1.msra.mxu0 0.0
  %727 = vmatprep.subr.mxu0 0.0
  %728 = vmatpush1.msra.mxu0 0.0
  %729 = vmatprep.subr.mxu0 0.0
  %730 = vmatpush1.msra.mxu0 0.0
  %731 = vmatprep.subr.mxu0 0.0
  %732 = vmatpush1.msra.mxu0 0.0
  %733 = vmatprep.subr.mxu0 0.0
  %734 = vmatpush1.msra.mxu0 0.0
  %735 = vmatprep.subr.mxu0 0.0
  %736 = vmatpush1.msra.mxu0 0.0
  %737 = vmatprep.subr.mxu0 0.0
  %738 = vmatpush1.msra.mxu0 0.0
  %739 = vmatprep.subr.mxu0 0.0
  %740 = vmatpush1.msra.mxu0 0.0
  %741 = vmatprep.subr.mxu0 0.0
  %742 = vmatpush1.msra.mxu0 0.0
  %743 = vmatprep.subr.mxu0 0.0
  %744 = vmatpush1.msra.mxu0 0.0
  %745 = vmatprep.subr.mxu0 0.0
  %746 = vmatpush1.msra.mxu0 0.0
  %747 = vmatprep.subr.mxu0 0.0
  %748 = vmatpush1.msra.mxu0 0.0
  %749 = vmatprep.subr.mxu0 0.0
  %750 = vmatpush1.msra.mxu0 0.0
  %751 = vmatprep.subr.mxu0 0.0
  %752 = vmatpush1.msra.mxu0 0.0
  %753 = vmatprep.subr.mxu0 0.0
  %754 = vmatpush1.msra.mxu0 0.0
  %755 = vmatprep.mubr.f32.mxu0 0.0
  %756 = vmatmul.mubr.f32.gmra.mrb[0].mxu0 %v689
  %v757 = vpop.f32.mrb[0].mxu0
  %v758 = vadd.f32 0.0, %v757
  %v759 = vpop.f32.mrb[0].mxu0
  %760 = vdwg.mxu0
  %v762 = vsel %vm42, %v663, 0
  %764 = vmatprep.subr.mxu0 0.0
  %765 = vmatpush1.msra.mxu0 %v665
  %766 = vmatprep.subr.mxu0 0.0
  %767 = vmatpush1.msra.mxu0 %v666
  %768 = vmatprep.subr.mxu0 0.0
  %769 = vmatpush1.msra.mxu0 %v667
  %770 = vmatprep.subr.mxu0 0.0
  %771 = vmatpush1.msra.mxu0 %v668
  %772 = vmatprep.subr.mxu0 0.0
  %773 = vmatpush1.msra.mxu0 0.0
  %774 = vmatprep.subr.mxu0 0.0
  %775 = vmatpush1.msra.mxu0 0.0
  %776 = vmatprep.subr.mxu0 0.0
  %777 = vmatpush1.msra.mxu0 0.0
  %778 = vmatprep.subr.mxu0 0.0
  %779 = vmatpush1.msra.mxu0 0.0
  %780 = vmatprep.subr.mxu0 0.0
  %781 = vmatpush1.msra.mxu0 0.0
  %782 = vmatprep.subr.mxu0 0.0
  %783 = vmatpush1.msra.mxu0 0.0
  %784 = vmatprep.subr.mxu0 0.0
  %785 = vmatpush1.msra.mxu0 0.0
  %786 = vmatprep.subr.mxu0 0.0
  %787 = vmatpush1.msra.mxu0 0.0
  %788 = vmatprep.subr.mxu0 0.0
  %789 = vmatpush1.msra.mxu0 0.0
  %790 = vmatprep.subr.mxu0 0.0
  %791 = vmatpush1.msra.mxu0 0.0
  %792 = vmatprep.subr.mxu0 0.0
  %793 = vmatpush1.msra.mxu0 0.0
  %794 = vmatprep.subr.mxu0 0.0
  %795 = vmatpush1.msra.mxu0 0.0
  %796 = vmatprep.subr.mxu0 0.0
  %797 = vmatpush1.msra.mxu0 0.0
  %798 = vmatprep.subr.mxu0 0.0
  %799 = vmatpush1.msra.mxu0 0.0
  %800 = vmatprep.subr.mxu0 0.0
  %801 = vmatpush1.msra.mxu0 0.0
  %802 = vmatprep.subr.mxu0 0.0
  %803 = vmatpush1.msra.mxu0 0.0
  %804 = vmatprep.subr.mxu0 0.0
  %805 = vmatpush1.msra.mxu0 0.0
  %806 = vmatprep.subr.mxu0 0.0
  %807 = vmatpush1.msra.mxu0 0.0
  %808 = vmatprep.subr.mxu0 0.0
  %809 = vmatpush1.msra.mxu0 0.0
  %810 = vmatprep.subr.mxu0 0.0
  %811 = vmatpush1.msra.mxu0 0.0
  %812 = vmatprep.subr.mxu0 0.0
  %813 = vmatpush1.msra.mxu0 0.0
  %814 = vmatprep.subr.mxu0 0.0
  %815 = vmatpush1.msra.mxu0 0.0
  %816 = vmatprep.subr.mxu0 0.0
  %817 = vmatpush1.msra.mxu0 0.0
  %818 = vmatprep.subr.mxu0 0.0
  %819 = vmatpush1.msra.mxu0 0.0
  %820 = vmatprep.subr.mxu0 0.0
  %821 = vmatpush1.msra.mxu0 0.0
  %822 = vmatprep.subr.mxu0 0.0
  %823 = vmatpush1.msra.mxu0 0.0
  %824 = vmatprep.subr.mxu0 0.0
  %825 = vmatpush1.msra.mxu0 0.0
  %826 = vmatprep.subr.mxu0 0.0
  %827 = vmatpush1.msra.mxu0 0.0
  %828 = vmatprep.mubr.f32.mxu0 0.0
  %829 = vmatmul.mubr.f32.gmra.mrb[0].mxu0 %v762
  %v830 = vpop.f32.mrb[0].mxu0
  %v831 = vadd.f32 %v758, %v830
  %v832 = vpop.f32.mrb[0].mxu0
  %833 = vdwg.mxu0
  %v834 = vld [vmem:[%s8 + $0x1] sm:$0x1]
  %v835 = vlaneseq
  %v836 = vshrl.u32 %v835, 7
  %v837 = vsub.s32 0, %v836
  %v838 = vrot.slane %v834, %v837
  %v839 = vadd.f32 %v831, %v838
  %vm840 = vcmp.gt.f32.partialorder %v839, 0.0
  %v841 = vmin.f32 %v839, 0.0
  %v842 = vmul.f32 %v841, 1.442695
  %v843 = vpow.pop %v842
  %v844 = vsub.f32 %v843, 1.0
  %v845 = vsel %vm840, %v839, %v844
  %v846 = vld [vmem:[%s6] sm:$0xff]
  %s847 = scalar_lea.vmem %s7, 96
  %v848 = vld [vmem:[%s847] sm:$0xff]
  %v849 = vld [vmem:[%s847 + $0x8] sm:$0xff]
  %v850 = vld [vmem:[%s847 + $0x10] sm:$0xff]
  %v851 = vld [vmem:[%s847 + $0x18] sm:$0xff]
  %v852 = vld [vmem:[%s8 + $0x2] sm:$0x1]
  %v853 = vlaneseq
  %v854 = vshrl.u32 %v853, 7
  %v855 = vsub.s32 0, %v854
  %v856 = vrot.slane %v852, %v855
  %v858 = vsel %vm42, %v846, 0
  %860 = vmatprep.subr.mxu0 0.0
  %861 = vmatpush1.msra.mxu0 %v848
  %862 = vmatprep.subr.mxu0 0.0
  %863 = vmatpush1.msra.mxu0 %v849
  %864 = vmatprep.subr.mxu0 0.0
  %865 = vmatpush1.msra.mxu0 %v850
  %866 = vmatprep.subr.mxu0 0.0
  %867 = vmatpush1.msra.mxu0 %v851
  %868 = vmatprep.subr.mxu0 0.0
  %869 = vmatpush1.msra.mxu0 0.0
  %870 = vmatprep.subr.mxu0 0.0
  %871 = vmatpush1.msra.mxu0 0.0
  %872 = vmatprep.subr.mxu0 0.0
  %873 = vmatpush1.msra.mxu0 0.0
  %874 = vmatprep.subr.mxu0 0.0
  %875 = vmatpush1.msra.mxu0 0.0
  %876 = vmatprep.subr.mxu0 0.0
  %877 = vmatpush1.msra.mxu0 0.0
  %878 = vmatprep.subr.mxu0 0.0
  %879 = vmatpush1.msra.mxu0 0.0
  %880 = vmatprep.subr.mxu0 0.0
  %881 = vmatpush1.msra.mxu0 0.0
  %882 = vmatprep.subr.mxu0 0.0
  %883 = vmatpush1.msra.mxu0 0.0
  %884 = vmatprep.subr.mxu0 0.0
  %885 = vmatpush1.msra.mxu0 0.0
  %886 = vmatprep.subr.mxu0 0.0
  %887 = vmatpush1.msra.mxu0 0.0
  %888 = vmatprep.subr.mxu0 0.0
  %889 = vmatpush1.msra.mxu0 0.0
  %890 = vmatprep.subr.mxu0 0.0
  %891 = vmatpush1.msra.mxu0 0.0
  %892 = vmatprep.subr.mxu0 0.0
  %893 = vmatpush1.msra.mxu0 0.0
  %894 = vmatprep.subr.mxu0 0.0
  %895 = vmatpush1.msra.mxu0 0.0
  %896 = vmatprep.subr.mxu0 0.0
  %897 = vmatpush1.msra.mxu0 0.0
  %898 = vmatprep.subr.mxu0 0.0
  %899 = vmatpush1.msra.mxu0 0.0
  %900 = vmatprep.subr.mxu0 0.0
  %901 = vmatpush1.msra.mxu0 0.0
  %902 = vmatprep.subr.mxu0 0.0
  %903 = vmatpush1.msra.mxu0 0.0
  %904 = vmatprep.subr.mxu0 0.0
  %905 = vmatpush1.msra.mxu0 0.0
  %906 = vmatprep.subr.mxu0 0.0
  %907 = vmatpush1.msra.mxu0 0.0
  %908 = vmatprep.subr.mxu0 0.0
  %909 = vmatpush1.msra.mxu0 0.0
  %910 = vmatprep.subr.mxu0 0.0
  %911 = vmatpush1.msra.mxu0 0.0
  %912 = vmatprep.subr.mxu0 0.0
  %913 = vmatpush1.msra.mxu0 0.0
  %914 = vmatprep.subr.mxu0 0.0
  %915 = vmatpush1.msra.mxu0 0.0
  %916 = vmatprep.subr.mxu0 0.0
  %917 = vmatpush1.msra.mxu0 0.0
  %918 = vmatprep.subr.mxu0 0.0
  %919 = vmatpush1.msra.mxu0 0.0
  %920 = vmatprep.subr.mxu0 0.0
  %921 = vmatpush1.msra.mxu0 0.0
  %922 = vmatprep.subr.mxu0 0.0
  %923 = vmatpush1.msra.mxu0 0.0
  %924 = vmatprep.mubr.f32.mxu0 0.0
  %925 = vmatmul.mubr.f32.gmra.mrb[0].mxu0 %v858
  %v926 = vpop.f32.mrb[0].mxu0
  %v927 = vadd.f32 %v856, %v926
  %v928 = vpop.f32.mrb[0].mxu0
  %929 = vdwg.mxu0
  %vm930 = vcmp.gt.f32.partialorder %v927, 0.0
  %v931 = vmin.f32 %v927, 0.0
  %v932 = vmul.f32 %v931, 1.442695
  %v933 = vpow.pop %v932
  %v934 = vsub.f32 %v933, 1.0
  %v935 = vsel %vm930, %v927, %v934
  %s936 = scalar_lea.vmem %s7, 128
  %v937 = vld [vmem:[%s936] sm:$0xff]
  %v938 = vld [vmem:[%s936 + $0x8] sm:$0xff]
  %v939 = vld [vmem:[%s936 + $0x10] sm:$0xff]
  %v940 = vld [vmem:[%s936 + $0x18] sm:$0xff]
  %s941 = scalar_lea.vmem %s7, 160
  %v942 = vld [vmem:[%s941] sm:$0xff]
  %v943 = vld [vmem:[%s941 + $0x8] sm:$0xff]
  %v944 = vld [vmem:[%s941 + $0x10] sm:$0xff]
  %v945 = vld [vmem:[%s941 + $0x18] sm:$0xff]
  %v947 = vsel %vm42, %v845, 0
  %949 = vmatprep.subr.mxu0 0.0
  %950 = vmatpush1.msra.mxu0 %v942
  %951 = vmatprep.subr.mxu0 0.0
  %952 = vmatpush1.msra.mxu0 %v943
  %953 = vmatprep.subr.mxu0 0.0
  %954 = vmatpush1.msra.mxu0 %v944
  %955 = vmatprep.subr.mxu0 0.0
  %956 = vmatpush1.msra.mxu0 %v945
  %957 = vmatprep.subr.mxu0 0.0
  %958 = vmatpush1.msra.mxu0 0.0
  %959 = vmatprep.subr.mxu0 0.0
  %960 = vmatpush1.msra.mxu0 0.0
  %961 = vmatprep.subr.mxu0 0.0
  %962 = vmatpush1.msra.mxu0 0.0
  %963 = vmatprep.subr.mxu0 0.0
  %964 = vmatpush1.msra.mxu0 0.0
  %965 = vmatprep.subr.mxu0 0.0
  %966 = vmatpush1.msra.mxu0 0.0
  %967 = vmatprep.subr.mxu0 0.0
  %968 = vmatpush1.msra.mxu0 0.0
  %969 = vmatprep.subr.mxu0 0.0
  %970 = vmatpush1.msra.mxu0 0.0
  %971 = vmatprep.subr.mxu0 0.0
  %972 = vmatpush1.msra.mxu0 0.0
  %973 = vmatprep.subr.mxu0 0.0
  %974 = vmatpush1.msra.mxu0 0.0
  %975 = vmatprep.subr.mxu0 0.0
  %976 = vmatpush1.msra.mxu0 0.0
  %977 = vmatprep.subr.mxu0 0.0
  %978 = vmatpush1.msra.mxu0 0.0
  %979 = vmatprep.subr.mxu0 0.0
  %980 = vmatpush1.msra.mxu0 0.0
  %981 = vmatprep.subr.mxu0 0.0
  %982 = vmatpush1.msra.mxu0 0.0
  %983 = vmatprep.subr.mxu0 0.0
  %984 = vmatpush1.msra.mxu0 0.0
  %985 = vmatprep.subr.mxu0 0.0
  %986 = vmatpush1.msra.mxu0 0.0
  %987 = vmatprep.subr.mxu0 0.0
  %988 = vmatpush1.msra.mxu0 0.0
  %989 = vmatprep.subr.mxu0 0.0
  %990 = vmatpush1.msra.mxu0 0.0
  %991 = vmatprep.subr.mxu0 0.0
  %992 = vmatpush1.msra.mxu0 0.0
  %993 = vmatprep.subr.mxu0 0.0
  %994 = vmatpush1.msra.mxu0 0.0
  %995 = vmatprep.subr.mxu0 0.0
  %996 = vmatpush1.msra.mxu0 0.0
  %997 = vmatprep.subr.mxu0 0.0
  %998 = vmatpush1.msra.mxu0 0.0
  %999 = vmatprep.subr.mxu0 0.0
  %1000 = vmatpush1.msra.mxu0 0.0
  %1001 = vmatprep.subr.mxu0 0.0
  %1002 = vmatpush1.msra.mxu0 0.0
  %1003 = vmatprep.subr.mxu0 0.0
  %1004 = vmatpush1.msra.mxu0 0.0
  %1005 = vmatprep.subr.mxu0 0.0
  %1006 = vmatpush1.msra.mxu0 0.0
  %1007 = vmatprep.subr.mxu0 0.0
  %1008 = vmatpush1.msra.mxu0 0.0
  %1009 = vmatprep.subr.mxu0 0.0
  %1010 = vmatpush1.msra.mxu0 0.0
  %1011 = vmatprep.subr.mxu0 0.0
  %1012 = vmatpush1.msra.mxu0 0.0
  %1013 = vmatprep.mubr.f32.mxu0 0.0
  %1014 = vmatmul.mubr.f32.gmra.mrb[0].mxu0 %v947
  %v1015 = vpop.f32.mrb[0].mxu0
  %v1016 = vadd.f32 0.0, %v1015
  %v1017 = vpop.f32.mrb[0].mxu0
  %1018 = vdwg.mxu0
  %v1020 = vsel %vm42, %v935, 0
  %1022 = vmatprep.subr.mxu0 0.0
  %1023 = vmatpush1.msra.mxu0 %v937
  %1024 = vmatprep.subr.mxu0 0.0
  %1025 = vmatpush1.msra.mxu0 %v938
  %1026 = vmatprep.subr.mxu0 0.0
  %1027 = vmatpush1.msra.mxu0 %v939
  %1028 = vmatprep.subr.mxu0 0.0
  %1029 = vmatpush1.msra.mxu0 %v940
  %1030 = vmatprep.subr.mxu0 0.0
  %1031 = vmatpush1.msra.mxu0 0.0
  %1032 = vmatprep.subr.mxu0 0.0
  %1033 = vmatpush1.msra.mxu0 0.0
  %1034 = vmatprep.subr.mxu0 0.0
  %1035 = vmatpush1.msra.mxu0 0.0
  %1036 = vmatprep.subr.mxu0 0.0
  %1037 = vmatpush1.msra.mxu0 0.0
  %1038 = vmatprep.subr.mxu0 0.0
  %1039 = vmatpush1.msra.mxu0 0.0
  %1040 = vmatprep.subr.mxu0 0.0
  %1041 = vmatpush1.msra.mxu0 0.0
  %1042 = vmatprep.subr.mxu0 0.0
  %1043 = vmatpush1.msra.mxu0 0.0
  %1044 = vmatprep.subr.mxu0 0.0
  %1045 = vmatpush1.msra.mxu0 0.0
  %1046 = vmatprep.subr.mxu0 0.0
  %1047 = vmatpush1.msra.mxu0 0.0
  %1048 = vmatprep.subr.mxu0 0.0
  %1049 = vmatpush1.msra.mxu0 0.0
  %1050 = vmatprep.subr.mxu0 0.0
  %1051 = vmatpush1.msra.mxu0 0.0
  %1052 = vmatprep.subr.mxu0 0.0
  %1053 = vmatpush1.msra.mxu0 0.0
  %1054 = vmatprep.subr.mxu0 0.0
  %1055 = vmatpush1.msra.mxu0 0.0
  %1056 = vmatprep.subr.mxu0 0.0
  %1057 = vmatpush1.msra.mxu0 0.0
  %1058 = vmatprep.subr.mxu0 0.0
  %1059 = vmatpush1.msra.mxu0 0.0
  %1060 = vmatprep.subr.mxu0 0.0
  %1061 = vmatpush1.msra.mxu0 0.0
  %1062 = vmatprep.subr.mxu0 0.0
  %1063 = vmatpush1.msra.mxu0 0.0
  %1064 = vmatprep.subr.mxu0 0.0
  %1065 = vmatpush1.msra.mxu0 0.0
  %1066 = vmatprep.subr.mxu0 0.0
  %1067 = vmatpush1.msra.mxu0 0.0
  %1068 = vmatprep.subr.mxu0 0.0
  %1069 = vmatpush1.msra.mxu0 0.0
  %1070 = vmatprep.subr.mxu0 0.0
  %1071 = vmatpush1.msra.mxu0 0.0
  %1072 = vmatprep.subr.mxu0 0.0
  %1073 = vmatpush1.msra.mxu0 0.0
  %1074 = vmatprep.subr.mxu0 0.0
  %1075 = vmatpush1.msra.mxu0 0.0
  %1076 = vmatprep.subr.mxu0 0.0
  %1077 = vmatpush1.msra.mxu0 0.0
  %1078 = vmatprep.subr.mxu0 0.0
  %1079 = vmatpush1.msra.mxu0 0.0
  %1080 = vmatprep.subr.mxu0 0.0
  %1081 = vmatpush1.msra.mxu0 0.0
  %1082 = vmatprep.subr.mxu0 0.0
  %1083 = vmatpush1.msra.mxu0 0.0
  %1084 = vmatprep.subr.mxu0 0.0
  %1085 = vmatpush1.msra.mxu0 0.0
  %1086 = vmatprep.mubr.f32.mxu0 0.0
  %1087 = vmatmul.mubr.f32.gmra.mrb[0].mxu0 %v1020
  %v1088 = vpop.f32.mrb[0].mxu0
  %v1089 = vadd.f32 %v1016, %v1088
  %v1090 = vpop.f32.mrb[0].mxu0
  %1091 = vdwg.mxu0
  %v1092 = vld [vmem:[%s8 + $0x3] sm:$0x1]
  %v1093 = vlaneseq
  %v1094 = vshrl.u32 %v1093, 7
  %v1095 = vsub.s32 0, %v1094
  %v1096 = vrot.slane %v1092, %v1095
  %v1097 = vadd.f32 %v1089, %v1096
  %vm1098 = vcmp.gt.f32.partialorder %v1097, 0.0
  %v1099 = vmin.f32 %v1097, 0.0
  %v1100 = vmul.f32 %v1099, 1.442695
  %v1101 = vpow.pop %v1100
  %v1102 = vsub.f32 %v1101, 1.0
  %v1103 = vsel %vm1098, %v1097, %v1102
  %s1104 = scalar_lea.vmem %s7, 192
  %v1105 = vld [vmem:[%s1104] sm:$0xff]
  %v1106 = vld [vmem:[%s1104 + $0x8] sm:$0xff]
  %v1107 = vld [vmem:[%s1104 + $0x10] sm:$0xff]
  %v1108 = vld [vmem:[%s1104 + $0x18] sm:$0xff]
  %v1109 = vld [vmem:[%s8 + $0x4] sm:$0x1]
  %v1110 = vlaneseq
  %v1111 = vshrl.u32 %v1110, 7
  %v1112 = vsub.s32 0, %v1111
  %v1113 = vrot.slane %v1109, %v1112
  %v1115 = vsel %vm42, %v1103, 0
  %1117 = vmatprep.subr.mxu0 0.0
  %1118 = vmatpush1.msra.mxu0 %v1105
  %1119 = vmatprep.subr.mxu0 0.0
  %1120 = vmatpush1.msra.mxu0 %v1106
  %1121 = vmatprep.subr.mxu0 0.0
  %1122 = vmatpush1.msra.mxu0 %v1107
  %1123 = vmatprep.subr.mxu0 0.0
  %1124 = vmatpush1.msra.mxu0 %v1108
  %1125 = vmatprep.subr.mxu0 0.0
  %1126 = vmatpush1.msra.mxu0 0.0
  %1127 = vmatprep.subr.mxu0 0.0
  %1128 = vmatpush1.msra.mxu0 0.0
  %1129 = vmatprep.subr.mxu0 0.0
  %1130 = vmatpush1.msra.mxu0 0.0
  %1131 = vmatprep.subr.mxu0 0.0
  %1132 = vmatpush1.msra.mxu0 0.0
  %1133 = vmatprep.subr.mxu0 0.0
  %1134 = vmatpush1.msra.mxu0 0.0
  %1135 = vmatprep.subr.mxu0 0.0
  %1136 = vmatpush1.msra.mxu0 0.0
  %1137 = vmatprep.subr.mxu0 0.0
  %1138 = vmatpush1.msra.mxu0 0.0
  %1139 = vmatprep.subr.mxu0 0.0
  %1140 = vmatpush1.msra.mxu0 0.0
  %1141 = vmatprep.subr.mxu0 0.0
  %1142 = vmatpush1.msra.mxu0 0.0
  %1143 = vmatprep.subr.mxu0 0.0
  %1144 = vmatpush1.msra.mxu0 0.0
  %1145 = vmatprep.subr.mxu0 0.0
  %1146 = vmatpush1.msra.mxu0 0.0
  %1147 = vmatprep.subr.mxu0 0.0
  %1148 = vmatpush1.msra.mxu0 0.0
  %1149 = vmatprep.subr.mxu0 0.0
  %1150 = vmatpush1.msra.mxu0 0.0
  %1151 = vmatprep.subr.mxu0 0.0
  %1152 = vmatpush1.msra.mxu0 0.0
  %1153 = vmatprep.subr.mxu0 0.0
  %1154 = vmatpush1.msra.mxu0 0.0
  %1155 = vmatprep.subr.mxu0 0.0
  %1156 = vmatpush1.msra.mxu0 0.0
  %1157 = vmatprep.subr.mxu0 0.0
  %1158 = vmatpush1.msra.mxu0 0.0
  %1159 = vmatprep.subr.mxu0 0.0
  %1160 = vmatpush1.msra.mxu0 0.0
  %1161 = vmatprep.subr.mxu0 0.0
  %1162 = vmatpush1.msra.mxu0 0.0
  %1163 = vmatprep.subr.mxu0 0.0
  %1164 = vmatpush1.msra.mxu0 0.0
  %1165 = vmatprep.subr.mxu0 0.0
  %1166 = vmatpush1.msra.mxu0 0.0
  %1167 = vmatprep.subr.mxu0 0.0
  %1168 = vmatpush1.msra.mxu0 0.0
  %1169 = vmatprep.subr.mxu0 0.0
  %1170 = vmatpush1.msra.mxu0 0.0
  %1171 = vmatprep.subr.mxu0 0.0
  %1172 = vmatpush1.msra.mxu0 0.0
  %1173 = vmatprep.subr.mxu0 0.0
  %1174 = vmatpush1.msra.mxu0 0.0
  %1175 = vmatprep.subr.mxu0 0.0
  %1176 = vmatpush1.msra.mxu0 0.0
  %1177 = vmatprep.subr.mxu0 0.0
  %1178 = vmatpush1.msra.mxu0 0.0
  %1179 = vmatprep.subr.mxu0 0.0
  %1180 = vmatpush1.msra.mxu0 0.0
  %1181 = vmatprep.mubr.f32.mxu0 0.0
  %1182 = vmatmul.mubr.f32.gmra.mrb[0].mxu0 %v1115
  %v1183 = vpop.f32.mrb[0].mxu0
  %v1184 = vadd.f32 %v1113, %v1183
  %v1185 = vpop.f32.mrb[0].mxu0
  %1186 = vdwg.mxu0
  %vm1187 = vcmp.gt.f32.partialorder %v1184, 0.0
  %v1188 = vmin.f32 %v1184, 0.0
  %v1189 = vmul.f32 %v1188, 1.442695
  %v1190 = vpow.pop %v1189
  %v1191 = vsub.f32 %v1190, 1.0
  %v1192 = vsel %vm1187, %v1184, %v1191
  %s1193 = scalar_lea.vmem %s7, 224
  %v1194 = vld [vmem:[%s1193] sm:$0xff]
  %v1195 = vld [vmem:[%s1193 + $0x8] sm:$0xff]
  %v1196 = vld [vmem:[%s1193 + $0x10] sm:$0xff]
  %v1197 = vld [vmem:[%s1193 + $0x18] sm:$0xff]
  %v1198 = vld [vmem:[%s8 + $0x5] sm:$0x1]
  %v1199 = vlaneseq
  %v1200 = vshrl.u32 %v1199, 7
  %v1201 = vsub.s32 0, %v1200
  %v1202 = vrot.slane %v1198, %v1201
  %v1204 = vsel %vm42, %v1192, 0
  %1206 = vmatprep.subr.mxu0 0.0
  %1207 = vmatpush1.msra.mxu0 %v1194
  %1208 = vmatprep.subr.mxu0 0.0
  %1209 = vmatpush1.msra.mxu0 %v1195
  %1210 = vmatprep.subr.mxu0 0.0
  %1211 = vmatpush1.msra.mxu0 %v1196
  %1212 = vmatprep.subr.mxu0 0.0
  %1213 = vmatpush1.msra.mxu0 %v1197
  %1214 = vmatprep.subr.mxu0 0.0
  %1215 = vmatpush1.msra.mxu0 0.0
  %1216 = vmatprep.subr.mxu0 0.0
  %1217 = vmatpush1.msra.mxu0 0.0
  %1218 = vmatprep.subr.mxu0 0.0
  %1219 = vmatpush1.msra.mxu0 0.0
  %1220 = vmatprep.subr.mxu0 0.0
  %1221 = vmatpush1.msra.mxu0 0.0
  %1222 = vmatprep.subr.mxu0 0.0
  %1223 = vmatpush1.msra.mxu0 0.0
  %1224 = vmatprep.subr.mxu0 0.0
  %1225 = vmatpush1.msra.mxu0 0.0
  %1226 = vmatprep.subr.mxu0 0.0
  %1227 = vmatpush1.msra.mxu0 0.0
  %1228 = vmatprep.subr.mxu0 0.0
  %1229 = vmatpush1.msra.mxu0 0.0
  %1230 = vmatprep.subr.mxu0 0.0
  %1231 = vmatpush1.msra.mxu0 0.0
  %1232 = vmatprep.subr.mxu0 0.0
  %1233 = vmatpush1.msra.mxu0 0.0
  %1234 = vmatprep.subr.mxu0 0.0
  %1235 = vmatpush1.msra.mxu0 0.0
  %1236 = vmatprep.subr.mxu0 0.0
  %1237 = vmatpush1.msra.mxu0 0.0
  %1238 = vmatprep.subr.mxu0 0.0
  %1239 = vmatpush1.msra.mxu0 0.0
  %1240 = vmatprep.subr.mxu0 0.0
  %1241 = vmatpush1.msra.mxu0 0.0
  %1242 = vmatprep.subr.mxu0 0.0
  %1243 = vmatpush1.msra.mxu0 0.0
  %1244 = vmatprep.subr.mxu0 0.0
  %1245 = vmatpush1.msra.mxu0 0.0
  %1246 = vmatprep.subr.mxu0 0.0
  %1247 = vmatpush1.msra.mxu0 0.0
  %1248 = vmatprep.subr.mxu0 0.0
  %1249 = vmatpush1.msra.mxu0 0.0
  %1250 = vmatprep.subr.mxu0 0.0
  %1251 = vmatpush1.msra.mxu0 0.0
  %1252 = vmatprep.subr.mxu0 0.0
  %1253 = vmatpush1.msra.mxu0 0.0
  %1254 = vmatprep.subr.mxu0 0.0
  %1255 = vmatpush1.msra.mxu0 0.0
  %1256 = vmatprep.subr.mxu0 0.0
  %1257 = vmatpush1.msra.mxu0 0.0
  %1258 = vmatprep.subr.mxu0 0.0
  %1259 = vmatpush1.msra.mxu0 0.0
  %1260 = vmatprep.subr.mxu0 0.0
  %1261 = vmatpush1.msra.mxu0 0.0
  %1262 = vmatprep.subr.mxu0 0.0
  %1263 = vmatpush1.msra.mxu0 0.0
  %1264 = vmatprep.subr.mxu0 0.0
  %1265 = vmatpush1.msra.mxu0 0.0
  %1266 = vmatprep.subr.mxu0 0.0
  %1267 = vmatpush1.msra.mxu0 0.0
  %1268 = vmatprep.subr.mxu0 0.0
  %1269 = vmatpush1.msra.mxu0 0.0
  %1270 = vmatprep.mubr.f32.mxu0 0.0
  %1271 = vmatmul.mubr.f32.gmra.mrb[0].mxu0 %v1204
  %v1272 = vpop.f32.mrb[0].mxu0
  %v1273 = vadd.f32 %v1202, %v1272
  %v1274 = vpop.f32.mrb[0].mxu0
  %1275 = vdwg.mxu0
  %vm1276 = vcmp.gt.f32.partialorder %v1273, 0.0
  %v1277 = vmin.f32 %v1273, 0.0
  %v1278 = vmul.f32 %v1277, 1.442695
  %v1279 = vpow.pop %v1278
  %v1280 = vsub.f32 %v1279, 1.0
  %v1281 = vsel %vm1276, %v1273, %v1280
  %s1282 = scalar_lea.vmem %s7, 256
  %v1283 = vld [vmem:[%s1282] sm:$0xff]
  %v1284 = vld [vmem:[%s1282 + $0x8] sm:$0xff]
  %v1285 = vld [vmem:[%s1282 + $0x10] sm:$0xff]
  %v1286 = vld [vmem:[%s1282 + $0x18] sm:$0xff]
  %s1287 = scalar_lea.vmem %s7, 288
  %v1288 = vld [vmem:[%s1287] sm:$0xff]
  %v1289 = vld [vmem:[%s1287 + $0x8] sm:$0xff]
  %v1290 = vld [vmem:[%s1287 + $0x10] sm:$0xff]
  %v1291 = vld [vmem:[%s1287 + $0x18] sm:$0xff]
  %v1293 = vsel %vm42, %v1281, 0
  %1295 = vmatprep.subr.mxu0 0.0
  %1296 = vmatpush1.msra.mxu0 %v1288
  %1297 = vmatprep.subr.mxu0 0.0
  %1298 = vmatpush1.msra.mxu0 %v1289
  %1299 = vmatprep.subr.mxu0 0.0
  %1300 = vmatpush1.msra.mxu0 %v1290
  %1301 = vmatprep.subr.mxu0 0.0
  %1302 = vmatpush1.msra.mxu0 %v1291
  %1303 = vmatprep.subr.mxu0 0.0
  %1304 = vmatpush1.msra.mxu0 0.0
  %1305 = vmatprep.subr.mxu0 0.0
  %1306 = vmatpush1.msra.mxu0 0.0
  %1307 = vmatprep.subr.mxu0 0.0
  %1308 = vmatpush1.msra.mxu0 0.0
  %1309 = vmatprep.subr.mxu0 0.0
  %1310 = vmatpush1.msra.mxu0 0.0
  %1311 = vmatprep.subr.mxu0 0.0
  %1312 = vmatpush1.msra.mxu0 0.0
  %1313 = vmatprep.subr.mxu0 0.0
  %1314 = vmatpush1.msra.mxu0 0.0
  %1315 = vmatprep.subr.mxu0 0.0
  %1316 = vmatpush1.msra.mxu0 0.0
  %1317 = vmatprep.subr.mxu0 0.0
  %1318 = vmatpush1.msra.mxu0 0.0
  %1319 = vmatprep.subr.mxu0 0.0
  %1320 = vmatpush1.msra.mxu0 0.0
  %1321 = vmatprep.subr.mxu0 0.0
  %1322 = vmatpush1.msra.mxu0 0.0
  %1323 = vmatprep.subr.mxu0 0.0
  %1324 = vmatpush1.msra.mxu0 0.0
  %1325 = vmatprep.subr.mxu0 0.0
  %1326 = vmatpush1.msra.mxu0 0.0
  %1327 = vmatprep.subr.mxu0 0.0
  %1328 = vmatpush1.msra.mxu0 0.0
  %1329 = vmatprep.subr.mxu0 0.0
  %1330 = vmatpush1.msra.mxu0 0.0
  %1331 = vmatprep.subr.mxu0 0.0
  %1332 = vmatpush1.msra.mxu0 0.0
  %1333 = vmatprep.subr.mxu0 0.0
  %1334 = vmatpush1.msra.mxu0 0.0
  %1335 = vmatprep.subr.mxu0 0.0
  %1336 = vmatpush1.msra.mxu0 0.0
  %1337 = vmatprep.subr.mxu0 0.0
  %1338 = vmatpush1.msra.mxu0 0.0
  %1339 = vmatprep.subr.mxu0 0.0
  %1340 = vmatpush1.msra.mxu0 0.0
  %1341 = vmatprep.subr.mxu0 0.0
  %1342 = vmatpush1.msra.mxu0 0.0
  %1343 = vmatprep.subr.mxu0 0.0
  %1344 = vmatpush1.msra.mxu0 0.0
  %1345 = vmatprep.subr.mxu0 0.0
  %1346 = vmatpush1.msra.mxu0 0.0
  %1347 = vmatprep.subr.mxu0 0.0
  %1348 = vmatpush1.msra.mxu0 0.0
  %1349 = vmatprep.subr.mxu0 0.0
  %1350 = vmatpush1.msra.mxu0 0.0
  %1351 = vmatprep.subr.mxu0 0.0
  %1352 = vmatpush1.msra.mxu0 0.0
  %1353 = vmatprep.subr.mxu0 0.0
  %1354 = vmatpush1.msra.mxu0 0.0
  %1355 = vmatprep.subr.mxu0 0.0
  %1356 = vmatpush1.msra.mxu0 0.0
  %1357 = vmatprep.subr.mxu0 0.0
  %1358 = vmatpush1.msra.mxu0 0.0
  %1359 = vmatprep.mubr.f32.mxu0 0.0
  %1360 = vmatmul.mubr.f32.gmra.mrb[0].mxu0 %v1293
  %v1361 = vpop.f32.mrb[0].mxu0
  %v1362 = vadd.f32 0.0, %v1361
  %v1363 = vpop.f32.mrb[0].mxu0
  %1364 = vdwg.mxu0
  %v1366 = vsel %vm42, %v121, 0
  %1368 = vmatprep.subr.mxu0 0.0
  %1369 = vmatpush1.msra.mxu0 %v1283
  %1370 = vmatprep.subr.mxu0 0.0
  %1371 = vmatpush1.msra.mxu0 %v1284
  %1372 = vmatprep.subr.mxu0 0.0
  %1373 = vmatpush1.msra.mxu0 %v1285
  %1374 = vmatprep.subr.mxu0 0.0
  %1375 = vmatpush1.msra.mxu0 %v1286
  %1376 = vmatprep.subr.mxu0 0.0
  %1377 = vmatpush1.msra.mxu0 0.0
  %1378 = vmatprep.subr.mxu0 0.0
  %1379 = vmatpush1.msra.mxu0 0.0
  %1380 = vmatprep.subr.mxu0 0.0
  %1381 = vmatpush1.msra.mxu0 0.0
  %1382 = vmatprep.subr.mxu0 0.0
  %1383 = vmatpush1.msra.mxu0 0.0
  %1384 = vmatprep.subr.mxu0 0.0
  %1385 = vmatpush1.msra.mxu0 0.0
  %1386 = vmatprep.subr.mxu0 0.0
  %1387 = vmatpush1.msra.mxu0 0.0
  %1388 = vmatprep.subr.mxu0 0.0
  %1389 = vmatpush1.msra.mxu0 0.0
  %1390 = vmatprep.subr.mxu0 0.0
  %1391 = vmatpush1.msra.mxu0 0.0
  %1392 = vmatprep.subr.mxu0 0.0
  %1393 = vmatpush1.msra.mxu0 0.0
  %1394 = vmatprep.subr.mxu0 0.0
  %1395 = vmatpush1.msra.mxu0 0.0
  %1396 = vmatprep.subr.mxu0 0.0
  %1397 = vmatpush1.msra.mxu0 0.0
  %1398 = vmatprep.subr.mxu0 0.0
  %1399 = vmatpush1.msra.mxu0 0.0
  %1400 = vmatprep.subr.mxu0 0.0
  %1401 = vmatpush1.msra.mxu0 0.0
  %1402 = vmatprep.subr.mxu0 0.0
  %1403 = vmatpush1.msra.mxu0 0.0
  %1404 = vmatprep.subr.mxu0 0.0
  %1405 = vmatpush1.msra.mxu0 0.0
  %1406 = vmatprep.subr.mxu0 0.0
  %1407 = vmatpush1.msra.mxu0 0.0
  %1408 = vmatprep.subr.mxu0 0.0
  %1409 = vmatpush1.msra.mxu0 0.0
  %1410 = vmatprep.subr.mxu0 0.0
  %1411 = vmatpush1.msra.mxu0 0.0
  %1412 = vmatprep.subr.mxu0 0.0
  %1413 = vmatpush1.msra.mxu0 0.0
  %1414 = vmatprep.subr.mxu0 0.0
  %1415 = vmatpush1.msra.mxu0 0.0
  %1416 = vmatprep.subr.mxu0 0.0
  %1417 = vmatpush1.msra.mxu0 0.0
  %1418 = vmatprep.subr.mxu0 0.0
  %1419 = vmatpush1.msra.mxu0 0.0
  %1420 = vmatprep.subr.mxu0 0.0
  %1421 = vmatpush1.msra.mxu0 0.0
  %1422 = vmatprep.subr.mxu0 0.0
  %1423 = vmatpush1.msra.mxu0 0.0
  %1424 = vmatprep.subr.mxu0 0.0
  %1425 = vmatpush1.msra.mxu0 0.0
  %1426 = vmatprep.subr.mxu0 0.0
  %1427 = vmatpush1.msra.mxu0 0.0
  %1428 = vmatprep.subr.mxu0 0.0
  %1429 = vmatpush1.msra.mxu0 0.0
  %1430 = vmatprep.subr.mxu0 0.0
  %1431 = vmatpush1.msra.mxu0 0.0
  %1432 = vmatprep.mubr.f32.mxu0 0.0
  %1433 = vmatmul.mubr.f32.gmra.mrb[0].mxu0 %v1366
  %v1434 = vpop.f32.mrb[0].mxu0
  %v1435 = vadd.f32 %v1362, %v1434
  %v1436 = vpop.f32.mrb[0].mxu0
  %1437 = vdwg.mxu0
  %v1438 = vld [vmem:[%s8 + $0x6] sm:$0x1]
  %v1439 = vlaneseq
  %v1440 = vshrl.u32 %v1439, 7
  %v1441 = vsub.s32 0, %v1440
  %v1442 = vrot.slane %v1438, %v1441
  %v1443 = vadd.f32 %v1435, %v1442
  %vm1444 = vcmp.gt.f32.partialorder %v1443, 0.0
  %v1445 = vmin.f32 %v1443, 0.0
  %v1446 = vmul.f32 %v1445, 1.442695
  %v1447 = vpow.pop %v1446
  %v1448 = vsub.f32 %v1447, 1.0
  %v1449 = vsel %vm1444, %v1443, %v1448
  %s1450 = scalar_lea.vmem %s7, 320
  %v1451 = vld [vmem:[%s1450] sm:$0xff]
  %v1452 = vld [vmem:[%s1450 + $0x8] sm:$0xff]
  %v1453 = vld [vmem:[%s1450 + $0x10] sm:$0xff]
  %v1454 = vld [vmem:[%s1450 + $0x18] sm:$0xff]
  %v1455 = vld [vmem:[%s8 + $0x7] sm:$0x1]
  %v1456 = vlaneseq
  %v1457 = vshrl.u32 %v1456, 7
  %v1458 = vsub.s32 0, %v1457
  %v1459 = vrot.slane %v1455, %v1458
  %v1461 = vsel %vm42, %v1449, 0
  %1463 = vmatprep.subr.mxu0 0.0
  %1464 = vmatpush1.msra.mxu0 %v1451
  %1465 = vmatprep.subr.mxu0 0.0
  %1466 = vmatpush1.msra.mxu0 %v1452
  %1467 = vmatprep.subr.mxu0 0.0
  %1468 = vmatpush1.msra.mxu0 %v1453
  %1469 = vmatprep.subr.mxu0 0.0
  %1470 = vmatpush1.msra.mxu0 %v1454
  %1471 = vmatprep.subr.mxu0 0.0
  %1472 = vmatpush1.msra.mxu0 0.0
  %1473 = vmatprep.subr.mxu0 0.0
  %1474 = vmatpush1.msra.mxu0 0.0
  %1475 = vmatprep.subr.mxu0 0.0
  %1476 = vmatpush1.msra.mxu0 0.0
  %1477 = vmatprep.subr.mxu0 0.0
  %1478 = vmatpush1.msra.mxu0 0.0
  %1479 = vmatprep.subr.mxu0 0.0
  %1480 = vmatpush1.msra.mxu0 0.0
  %1481 = vmatprep.subr.mxu0 0.0
  %1482 = vmatpush1.msra.mxu0 0.0
  %1483 = vmatprep.subr.mxu0 0.0
  %1484 = vmatpush1.msra.mxu0 0.0
  %1485 = vmatprep.subr.mxu0 0.0
  %1486 = vmatpush1.msra.mxu0 0.0
  %1487 = vmatprep.subr.mxu0 0.0
  %1488 = vmatpush1.msra.mxu0 0.0
  %1489 = vmatprep.subr.mxu0 0.0
  %1490 = vmatpush1.msra.mxu0 0.0
  %1491 = vmatprep.subr.mxu0 0.0
  %1492 = vmatpush1.msra.mxu0 0.0
  %1493 = vmatprep.subr.mxu0 0.0
  %1494 = vmatpush1.msra.mxu0 0.0
  %1495 = vmatprep.subr.mxu0 0.0
  %1496 = vmatpush1.msra.mxu0 0.0
  %1497 = vmatprep.subr.mxu0 0.0
  %1498 = vmatpush1.msra.mxu0 0.0
  %1499 = vmatprep.subr.mxu0 0.0
  %1500 = vmatpush1.msra.mxu0 0.0
  %1501 = vmatprep.subr.mxu0 0.0
  %1502 = vmatpush1.msra.mxu0 0.0
  %1503 = vmatprep.subr.mxu0 0.0
  %1504 = vmatpush1.msra.mxu0 0.0
  %1505 = vmatprep.subr.mxu0 0.0
  %1506 = vmatpush1.msra.mxu0 0.0
  %1507 = vmatprep.subr.mxu0 0.0
  %1508 = vmatpush1.msra.mxu0 0.0
  %1509 = vmatprep.subr.mxu0 0.0
  %1510 = vmatpush1.msra.mxu0 0.0
  %1511 = vmatprep.subr.mxu0 0.0
  %1512 = vmatpush1.msra.mxu0 0.0
  %1513 = vmatprep.subr.mxu0 0.0
  %1514 = vmatpush1.msra.mxu0 0.0
  %1515 = vmatprep.subr.mxu0 0.0
  %1516 = vmatpush1.msra.mxu0 0.0
  %1517 = vmatprep.subr.mxu0 0.0
  %1518 = vmatpush1.msra.mxu0 0.0
  %1519 = vmatprep.subr.mxu0 0.0
  %1520 = vmatpush1.msra.mxu0 0.0
  %1521 = vmatprep.subr.mxu0 0.0
  %1522 = vmatpush1.msra.mxu0 0.0
  %1523 = vmatprep.subr.mxu0 0.0
  %1524 = vmatpush1.msra.mxu0 0.0
  %1525 = vmatprep.subr.mxu0 0.0
  %1526 = vmatpush1.msra.mxu0 0.0
  %1527 = vmatprep.mubr.f32.mxu0 0.0
  %1528 = vmatmul.mubr.f32.gmra.mrb[0].mxu0 %v1461
  %v1529 = vpop.f32.mrb[0].mxu0
  %v1530 = vadd.f32 %v1459, %v1529
  %v1531 = vpop.f32.mrb[0].mxu0
  %1532 = vdwg.mxu0
  %vm1533 = vcmp.gt.f32.partialorder %v1530, 0.0
  %v1534 = vmin.f32 %v1530, 0.0
  %v1535 = vmul.f32 %v1534, 1.442695
  %v1536 = vpow.pop %v1535
  %v1537 = vsub.f32 %v1536, 1.0
  %v1538 = vsel %vm1533, %v1530, %v1537
  %v1539 = vld [vmem:[%s8 + $0x8] sm:$0x1]
  %v1540 = vlaneseq
  %v1541 = vshrl.u32 %v1540, 7
  %v1542 = vsub.s32 0, %v1541
  %v1543 = vrot.slane %v1539, %v1542
  %v1544 = vmul.f32 %v1538, %v1543
  %v1545 = vsel %vm42, %v1544, 0.0
  %1546 = vadd.xlane.f32.xlu0 %v1545
  %v1547 = vpop.xlane.xlu0 %1546
  %v1548 = vld [vmem:[%s8 + $0x9] sm:$0x1]
  %v1549 = vlaneseq
  %v1550 = vshrl.u32 %v1549, 7
  %v1551 = vsub.s32 0, %v1550
  %v1552 = vrot.slane %v1548, %v1551
  %v1553 = vadd.f32 %v1547, %v1552
  %vm1554 = vcmask 7168
  %1555 = vst.msk [vmem:[%s9] sm:$0xff] %vm1554, %v1553
  // Predicated region
  $region38: #{scenerec_forward.3} parent=0 // pred_check
    _
  $region39: #{scenerec_forward.3} parent=0 // pred_check_branch
    %1557 = sbr.rel (0) target = $region41
  $region40: #{scenerec_forward.3} parent=0 // pred_region
    _
  $region41: #{scenerec_forward.3} parent=0 // pred_fallthru
    _
  // Predicated region
  $region42: #{scenerec_forward.3} parent=0 // pred_check
    _
  $region43: #{scenerec_forward.3} parent=0 // pred_check_branch
    %1559 = sbr.rel (0) target = $region45
  $region44: #{scenerec_forward.3} parent=0 // pred_region
    _
  $region45: #{scenerec_forward.3} parent=0 // pred_fallthru
    _

</llo_original>
